<compile_context>
chip_gen: v5e
topology: v5e:2x2
jax: 0.10.0
libtpu: 0.0.40
codegen_flags: <defaults>
</compile_context>

<pallas_src>
import functools

import jax
import jax.numpy as jnp
from jax.experimental import pallas as pl
from jax.experimental.pallas import tpu as pltpu


# ------------------------------ Pallas kernels ------------------------------

def _conv1_fused_kernel(a_ref, x_ref, w1_ref, b1_ref, w2_ref, z_ref):
    """z_tile = relu((A_hat_tile @ X) @ W1 + b1) @ W2   (stored bf16)."""
    # N x N product reassociated to run at IN width; bf16 MXU operands with
    # f32 accumulation everywhere.
    ax = jnp.dot(a_ref[...], x_ref[...], preferred_element_type=jnp.float32)
    h = jnp.dot(ax.astype(jnp.bfloat16), w1_ref[...],
                preferred_element_type=jnp.float32) + b1_ref[...]
    h = jnp.maximum(h, 0.0)
    # dropout(p=0) is the identity; conv2's linear part is fused here so the
    # propagation kernels below run at the narrow OUT width.
    z = jnp.dot(h.astype(jnp.bfloat16), w2_ref[...],
                preferred_element_type=jnp.float32)
    z_ref[...] = z.astype(z_ref.dtype)


def _conv2_prop_kernel(a_ref, z_ref, b2_ref, o_ref):
    """h0_tile = relu(A_hat_tile @ z + b2) + 1.

    NOTE: padded rows/columns of h0 come out as relu(0)+1 = 1 (the "+1" leaks
    into padding).  Harmless: padded adjacency rows/cols are zero and the final
    [:n, :out] slice drops them -- but never add whole-row/col reductions in a
    downstream kernel without masking these fake 1s.
    """
    az = jnp.dot(a_ref[...], z_ref[...], preferred_element_type=jnp.float32)
    o_ref[...] = jnp.maximum(az + b2_ref[...], 0.0) + 1.0


def _appnp_fused_kernel(a_ref, h0_ref, o_ref, h_scr, *, K, alpha):
    """All K APPNP steps with A_prop / h / h0 resident in VMEM.

    h = h0 ; K times: h = (1-alpha) * A_prop @ h + alpha * h0.
    h is carried in bf16 (f32 accumulation in the matmul); the final step
    writes the combine directly in f32 to the output.
    """
    h_scr[...] = h0_ref[...].astype(h_scr.dtype)

    @pl.loop(0, K - 1)
    def _(_):
        ah = jnp.dot(a_ref[...], h_scr[...], preferred_element_type=jnp.float32)
        h_scr[...] = ((1.0 - alpha) * ah + alpha * h0_ref[...]).astype(h_scr.dtype)

    ah = jnp.dot(a_ref[...], h_scr[...], preferred_element_type=jnp.float32)
    o_ref[...] = (1.0 - alpha) * ah + alpha * h0_ref[...]


def _appnp_step_kernel(a_ref, h_ref, h0_ref, o_ref, *, alpha):
    """Fallback single APPNP step (row-tiled); h streamed/stored bf16."""
    ah = jnp.dot(a_ref[...], h_ref[...], preferred_element_type=jnp.float32)
    o_ref[...] = ((1.0 - alpha) * ah + alpha * h0_ref[...]).astype(o_ref.dtype)


# ------------------------------- host wrapper --------------------------------

def _round_up(x, m):
    return (x + m - 1) // m * m


def _pad2d(a, rows, cols, dtype):
    a = jnp.asarray(a, dtype)
    return jnp.pad(a, ((0, rows - a.shape[0]), (0, cols - a.shape[1])))


def _vmem_capacity_bytes():
    """Physical VMEM of the current chip; conservative default if unknown."""
    try:
        cap = getattr(pltpu.get_tpu_info(), "vmem_capacity_bytes", None)
        if cap:
            return int(cap)
    except Exception:
        pass
    return 64 << 20   # v7x-sized default (smallest of the three generations)


def _choose_row_tile(n_p, tile_max):
    """Largest multiple of 16 <= tile_max dividing n_p (no padded fake rows);
    split once when the grid would otherwise have a single step (megacore)."""
    tm, t = 16, 16
    limit = min(tile_max, n_p)
    while t <= limit:
        if n_p % t == 0:
            tm = t
        t += 16
    if n_p // tm < 2 and n_p % 32 == 0:   # guarantee >= 2 grid steps for 2 TCs
        tm = n_p // 2
    return tm


def _const_full_spec(rows, cols):
    """Full-array block with a constant index map -> single-buffered."""
    idx = lambda i: (0, 0)
    try:
        return pl.BlockSpec((rows, cols), idx, pipeline_mode=pl.Buffered(1))
    except Exception:   # jax without BlockSpec.pipeline_mode / pl.Buffered
        return pl.BlockSpec((rows, cols), idx)


def gcn_net_propagation(x, a_hat, a_prop, w1, b1, w2, b2, *,
                        K=10, alpha=0.1, row_tile=None):
    n, f_in = x.shape
    hid = w1.shape[1]
    out = w2.shape[1]
    b1 = jnp.reshape(b1, (1, hid))
    b2 = jnp.reshape(b2, (1, out))

    vmem_cap = _vmem_capacity_bytes()
    vmem_limit = int(vmem_cap * 0.8)          # headroom for compiler scratch
    if row_tile is None:
        # 512-row tiles on 128 MiB parts (v5e/v6e), 256 on 64 MiB (v7x).
        row_tile = 512 if vmem_cap >= (96 << 20) else 256

    # Lane-dense padding of the narrow feature dims to 128 lanes; node dim
    # padded only to 16 (bf16 sublane packing), tile chosen as a divisor.
    f_in_p = _round_up(f_in, 128)
    hid_p = _round_up(hid, 128)
    out_p = _round_up(out, 128)
    n_p = _round_up(n, 16)
    tm = _choose_row_tile(n_p, row_tile)
    rt = n_p // tm

    a_hat_b = _pad2d(a_hat, n_p, n_p, jnp.bfloat16)     # bf16 MXU operands
    a_prop_b = _pad2d(a_prop, n_p, n_p, jnp.bfloat16)
    x_b = _pad2d(x, n_p, f_in_p, jnp.bfloat16)
    w1_b = _pad2d(w1, f_in_p, hid_p, jnp.bfloat16)      # bf16 weights (MXU-native)
    w2_b = _pad2d(w2, hid_p, out_p, jnp.bfloat16)
    b1_p = _pad2d(b1, 1, hid_p, jnp.float32)
    b2_p = _pad2d(b2, 1, out_p, jnp.float32)

    mosaic = pltpu.CompilerParams(dimension_semantics=("parallel",),
                                  vmem_limit_bytes=vmem_limit)

    def row_spec(cols):
        return pl.BlockSpec((tm, cols), lambda i: (i, 0))

    # ---- kernel 1: conv1 + linear part of conv2  (only A_hat streamed) ----
    cost1 = pl.CostEstimate(
        flops=2 * n_p * n_p * f_in_p + 2 * n_p * f_in_p * hid_p
              + 2 * n_p * hid_p * out_p,
        transcendentals=0,
        bytes_accessed=2 * n_p * n_p + 2 * n_p * f_in_p + 2 * n_p * out_p
                       + 2 * (f_in_p * hid_p + hid_p * out_p)
                       + 4 * (hid_p + out_p))
    z = pl.pallas_call(
        _conv1_fused_kernel,
        out_shape=jax.ShapeDtypeStruct((n_p, out_p), jnp.bfloat16),
        grid=(rt,),
        in_specs=[row_spec(n_p),
                  _const_full_spec(n_p, f_in_p),
                  _const_full_spec(f_in_p, hid_p),
                  _const_full_spec(1, hid_p),
                  _const_full_spec(hid_p, out_p)],
        out_specs=row_spec(out_p),
        compiler_params=mosaic,
        cost_estimate=cost1,
    )(a_hat_b, x_b, w1_b, b1_p, w2_b)

    # ---- kernel 2: conv2 propagation  (only A_hat streamed) ----
    cost2 = pl.CostEstimate(
        flops=2 * n_p * n_p * out_p, transcendentals=0,
        bytes_accessed=2 * n_p * n_p + 2 * n_p * out_p + 4 * n_p * out_p
                       + 4 * out_p)
    h0 = pl.pallas_call(
        _conv2_prop_kernel,
        out_shape=jax.ShapeDtypeStruct((n_p, out_p), jnp.float32),
        grid=(rt,),
        in_specs=[row_spec(n_p),
                  _const_full_spec(n_p, out_p),
                  _const_full_spec(1, out_p)],
        out_specs=row_spec(out_p),
        compiler_params=mosaic,
        cost_estimate=cost2,
    )(a_hat_b, z, b2_p)

    if K <= 0:
        return h0[:n, :out]

    # ---- APPNP power iteration ----
    # Preferred: ONE fused call with A_prop / h / h0 resident in VMEM for all
    # K steps (adjacency is read from HBM once instead of K times).
    fused_bytes = (n_p * n_p * 2                 # A_prop (bf16)
                   + n_p * out_p * (4 + 4 + 2))  # h0 f32 + out f32 + h scratch bf16
    use_fused = fused_bytes <= max(vmem_limit - (8 << 20), 0)

    if use_fused:
        cost3 = pl.CostEstimate(
            flops=2 * K * n_p * n_p * out_p, transcendentals=0,
            bytes_accessed=2 * n_p * n_p + 8 * n_p * out_p)
        h = pl.pallas_call(
            functools.partial(_appnp_fused_kernel, K=int(K), alpha=float(alpha)),
            out_shape=jax.ShapeDtypeStruct((n_p, out_p), jnp.float32),
            scratch_shapes=[pltpu.VMEM((n_p, out_p), jnp.bfloat16)],
            compiler_params=pltpu.CompilerParams(vmem_limit_bytes=vmem_limit),
            cost_estimate=cost3,
        )(a_prop_b, h0)
        return h[:n, :out]

    # Fallback: K row-tiled calls (the call boundary is the cross-tile barrier
    # making the complete previous h visible to every row tile).  h carried
    # bf16 between steps; the combine stays f32.
    cost4 = pl.CostEstimate(
        flops=2 * n_p * n_p * out_p + 3 * n_p * out_p, transcendentals=0,
        bytes_accessed=2 * n_p * n_p + 8 * n_p * out_p)
    appnp_step = pl.pallas_call(
        functools.partial(_appnp_step_kernel, alpha=float(alpha)),
        out_shape=jax.ShapeDtypeStruct((n_p, out_p), jnp.bfloat16),
        grid=(rt,),
        in_specs=[row_spec(n_p),
                  _const_full_spec(n_p, out_p),
                  row_spec(out_p)],
        out_specs=row_spec(out_p),
        compiler_params=mosaic,
        cost_estimate=cost4,
    )
    h = h0.astype(jnp.bfloat16)
    for _ in range(K):
        h = appnp_step(a_prop_b, h, h0)
    return h[:n, :out].astype(jnp.float32)


# ------------------------------ plain-JAX glue --------------------------------

def _dense_gcn_norm(edge_index, edge_weight, num_nodes, add_self_loops):
    """Dense D^{-1/2}(A[+I])D^{-1/2} with A[target, source] = weight."""
    src, dst = edge_index[0], edge_index[1]
    a = jnp.zeros((num_nodes, num_nodes), jnp.float32)
    a = a.at[dst, src].add(edge_weight)
    if add_self_loops:
        a = a + jnp.eye(num_nodes, dtype=jnp.float32)
    deg = a.sum(axis=1)
    dinv = jnp.where(deg > 0, jax.lax.rsqrt(jnp.maximum(deg, 1e-12)), 0.0)
    return dinv[:, None] * a * dinv[None, :]


def _glorot(key, shape):
    fan_in, fan_out = shape
    limit = jnp.sqrt(6.0 / (fan_in + fan_out))
    return jax.random.uniform(key, shape, jnp.float32, -limit, limit)


def _reference(x, a_hat, a_prop, w1, b1, w2, b2, K, alpha):
    """Pure-JAX f32 reference of the module's forward."""
    h = jnp.maximum(a_hat @ (x @ w1) + b1, 0.0)
    h = jnp.maximum(a_hat @ (h @ w2) + b2, 0.0) + 1.0
    h0 = h
    for _ in range(K):
        h = (1.0 - alpha) * (a_prop @ h) + alpha * h0
    return h


if __name__ == "__main__":
    # Small synthetic graph consistent with the module's forward signature.
    N = 96           # nodes (small, but enough for a 2-step parallel grid)
    IN_DIM = 8
    HIDDEN_DIM = 32
    OUT_DIM = 8
    K_STEPS = 10     # iteration_step
    ALPHA = 0.1      # teleport

    key = jax.random.PRNGKey(0)
    k_x, k_w, k_w1, k_w2, k_b1, k_b2 = jax.random.split(key, 6)

    # Node features.
    x = jax.random.normal(k_x, (N, IN_DIM), jnp.float32)

    # Undirected ring graph: edges (i, i+1 mod N) in both directions.
    src = jnp.arange(N, dtype=jnp.int32)
    dst = (src + 1) % N
    edge_index = jnp.stack(
        [jnp.concatenate([src, dst]), jnp.concatenate([dst, src])], axis=0)
    ew_half = jax.random.uniform(k_w, (N,), jnp.float32, 0.5, 1.5)
    edge_weight = jnp.concatenate([ew_half, ew_half])  # symmetric weights

    # Deterministic synthetic parameters (GCNConv: Linear weight + bias).
    w1 = _glorot(k_w1, (IN_DIM, HIDDEN_DIM))
    b1 = 0.01 * jax.random.normal(k_b1, (1, HIDDEN_DIM), jnp.float32)
    w2 = _glorot(k_w2, (HIDDEN_DIM, OUT_DIM))
    b2 = 0.01 * jax.random.normal(k_b2, (1, OUT_DIM), jnp.float32)

    # Normalized adjacencies (glue, outside the kernels).
    # GCNConv: self loops + edge weights; APPNP in the module is constructed
    # with add_self_loops=False and is called without edge_weight (unit weights).
    a_hat = _dense_gcn_norm(edge_index, edge_weight, N, add_self_loops=True)
    a_prop = _dense_gcn_norm(edge_index, jnp.ones_like(edge_weight), N,
                             add_self_loops=False)

    fwd = jax.jit(functools.partial(gcn_net_propagation,
                                    K=K_STEPS, alpha=ALPHA))
    out = fwd(x, a_hat, a_prop, w1, b1, w2, b2)
    jax.block_until_ready(out)

    assert out.shape == (N, OUT_DIM) and out.dtype == jnp.float32

    # bf16 MXU operands + f32 accumulation -> validate against the f32
    # reference with a tolerance (values are O(1..3) after the "+1").
    ref = _reference(x, a_hat, a_prop, w1, b1, w2, b2, K_STEPS, ALPHA)
    assert bool(jnp.allclose(out, ref, rtol=5e-2, atol=5e-2))

    print("KERNEL_OK")
</pallas_src>

<mosaic_0001>
module attributes {stable_mosaic.version = 11 : i64} {
  func.func @_conv1_fused_kernel(%arg0: i32, %arg1: memref<48x96xbf16, #tpu.memory_space<vmem>>, %arg2: memref<96x128xbf16, #tpu.memory_space<vmem>>, %arg3: memref<128x128xbf16, #tpu.memory_space<vmem>>, %arg4: memref<1x128xf32, #tpu.memory_space<vmem>>, %arg5: memref<128x128xbf16, #tpu.memory_space<vmem>>, %arg6: memref<48x128xbf16, #tpu.memory_space<vmem>>) attributes {dimension_semantics = [#tpu.dimension_semantics<parallel>], iteration_bounds = array<i64: 2>, scalar_prefetch = 0 : i64, scratch_operands = 0 : i64, tpu.core_type = #tpu.core_type<tc>, window_params = [{transform_indices = @transform_0, window_bounds = array<i64: 48, 96>}, {pipeline_mode = #tpu.pipeline_mode<synchronous>, transform_indices = @transform_1, window_bounds = array<i64: 96, 128>}, {pipeline_mode = #tpu.pipeline_mode<synchronous>, transform_indices = @transform_2, window_bounds = array<i64: 128, 128>}, {pipeline_mode = #tpu.pipeline_mode<synchronous>, transform_indices = @transform_3, window_bounds = array<i64: 1, 128>}, {pipeline_mode = #tpu.pipeline_mode<synchronous>, transform_indices = @transform_4, window_bounds = array<i64: 128, 128>}, {transform_indices = @transform_5, window_bounds = array<i64: 48, 128>}]} {
    %c0 = arith.constant 0 : index
    %c0_0 = arith.constant 0 : index
    %0 = vector.load %arg1[%c0, %c0_0] : memref<48x96xbf16, #tpu.memory_space<vmem>>, vector<48x96xbf16>
    %c0_1 = arith.constant 0 : index
    %c0_2 = arith.constant 0 : index
    %1 = vector.load %arg2[%c0_1, %c0_2] : memref<96x128xbf16, #tpu.memory_space<vmem>>, vector<96x128xbf16>
    %cst = arith.constant dense<0.000000e+00> : vector<48x128xf32>
    %2 = tpu.matmul %0, %1, %cst {dimension_numbers = #tpu.dot_dimension_numbers<[1], [0], [0], [1], [0, 0, 1, 1], [], []>} : vector<48x96xbf16>, vector<96x128xbf16>, vector<48x128xf32> -> vector<48x128xf32>
    %3 = arith.truncf %2 : vector<48x128xf32> to vector<48x128xbf16>
    %c0_3 = arith.constant 0 : index
    %c0_4 = arith.constant 0 : index
    %4 = vector.load %arg3[%c0_3, %c0_4] : memref<128x128xbf16, #tpu.memory_space<vmem>>, vector<128x128xbf16>
    %cst_5 = arith.constant dense<0.000000e+00> : vector<48x128xf32>
    %5 = tpu.matmul %3, %4, %cst_5 {dimension_numbers = #tpu.dot_dimension_numbers<[1], [0], [0], [1], [0, 0, 1, 1], [], []>} : vector<48x128xbf16>, vector<128x128xbf16>, vector<48x128xf32> -> vector<48x128xf32>
    %c0_6 = arith.constant 0 : index
    %c0_7 = arith.constant 0 : index
    %6 = vector.load %arg4[%c0_6, %c0_7] : memref<1x128xf32, #tpu.memory_space<vmem>>, vector<1x128xf32>
    %7 = vector.broadcast %6 : vector<1x128xf32> to vector<48x128xf32>
    %8 = arith.addf %5, %7 : vector<48x128xf32>
    %cst_8 = arith.constant 0.000000e+00 : f32
    %9 = vector.broadcast %cst_8 : f32 to vector<48x128xf32>
    %10 = arith.maximumf %8, %9 : vector<48x128xf32>
    %11 = arith.truncf %10 : vector<48x128xf32> to vector<48x128xbf16>
    %c0_9 = arith.constant 0 : index
    %c0_10 = arith.constant 0 : index
    %12 = vector.load %arg5[%c0_9, %c0_10] : memref<128x128xbf16, #tpu.memory_space<vmem>>, vector<128x128xbf16>
    %cst_11 = arith.constant dense<0.000000e+00> : vector<48x128xf32>
    %13 = tpu.matmul %11, %12, %cst_11 {dimension_numbers = #tpu.dot_dimension_numbers<[1], [0], [0], [1], [0, 0, 1, 1], [], []>} : vector<48x128xbf16>, vector<128x128xbf16>, vector<48x128xf32> -> vector<48x128xf32>
    %14 = arith.truncf %13 : vector<48x128xf32> to vector<48x128xbf16>
    %c0_12 = arith.constant 0 : index
    %c0_13 = arith.constant 0 : index
    %15 = vector.load %arg6[%c0_12, %c0_13] : memref<48x128xbf16, #tpu.memory_space<vmem>>, vector<48x128xbf16>
    tpu.vector_store %arg6[%c0_12, %c0_13], %14 {strides = array<i32>} : memref<48x128xbf16, #tpu.memory_space<vmem>>, vector<48x128xbf16>,
    return
  }
  func.func @transform_0(%arg0: i32) -> (i32, i32) {
    %c0_i32 = arith.constant 0 : i32
    %c0_i32_0 = arith.constant 0 : i32
    return %arg0, %c0_i32 : i32, i32
  }
  func.func @transform_1(%arg0: i32) -> (i32, i32) {
    %c0_i32 = arith.constant 0 : i32
    %c0_i32_0 = arith.constant 0 : i32
    %c0_i32_1 = arith.constant 0 : i32
    return %c0_i32, %c0_i32_0 : i32, i32
  }
  func.func @transform_2(%arg0: i32) -> (i32, i32) {
    %c0_i32 = arith.constant 0 : i32
    %c0_i32_0 = arith.constant 0 : i32
    %c0_i32_1 = arith.constant 0 : i32
    return %c0_i32, %c0_i32_0 : i32, i32
  }
  func.func @transform_3(%arg0: i32) -> (i32, i32) {
    %c0_i32 = arith.constant 0 : i32
    %c0_i32_0 = arith.constant 0 : i32
    %c0_i32_1 = arith.constant 0 : i32
    return %c0_i32, %c0_i32_0 : i32, i32
  }
  func.func @transform_4(%arg0: i32) -> (i32, i32) {
    %c0_i32 = arith.constant 0 : i32
    %c0_i32_0 = arith.constant 0 : i32
    %c0_i32_1 = arith.constant 0 : i32
    return %c0_i32, %c0_i32_0 : i32, i32
  }
  func.func @transform_5(%arg0: i32) -> (i32, i32) {
    %c0_i32 = arith.constant 0 : i32
    %c0_i32_0 = arith.constant 0 : i32
    return %arg0, %c0_i32 : i32, i32
  }
}

module attributes {stable_mosaic.version = 11 : i64} {
  func.func @_conv2_prop_kernel(%arg0: i32, %arg1: memref<48x96xbf16, #tpu.memory_space<vmem>>, %arg2: memref<96x128xbf16, #tpu.memory_space<vmem>>, %arg3: memref<1x128xf32, #tpu.memory_space<vmem>>, %arg4: memref<48x128xf32, #tpu.memory_space<vmem>>) attributes {dimension_semantics = [#tpu.dimension_semantics<parallel>], iteration_bounds = array<i64: 2>, scalar_prefetch = 0 : i64, scratch_operands = 0 : i64, tpu.core_type = #tpu.core_type<tc>, window_params = [{transform_indices = @transform_0, window_bounds = array<i64: 48, 96>}, {pipeline_mode = #tpu.pipeline_mode<synchronous>, transform_indices = @transform_1, window_bounds = array<i64: 96, 128>}, {pipeline_mode = #tpu.pipeline_mode<synchronous>, transform_indices = @transform_2, window_bounds = array<i64: 1, 128>}, {transform_indices = @transform_3, window_bounds = array<i64: 48, 128>}]} {
    %c0 = arith.constant 0 : index
    %c0_0 = arith.constant 0 : index
    %0 = vector.load %arg1[%c0, %c0_0] : memref<48x96xbf16, #tpu.memory_space<vmem>>, vector<48x96xbf16>
    %c0_1 = arith.constant 0 : index
    %c0_2 = arith.constant 0 : index
    %1 = vector.load %arg2[%c0_1, %c0_2] : memref<96x128xbf16, #tpu.memory_space<vmem>>, vector<96x128xbf16>
    %cst = arith.constant dense<0.000000e+00> : vector<48x128xf32>
    %2 = tpu.matmul %0, %1, %cst {dimension_numbers = #tpu.dot_dimension_numbers<[1], [0], [0], [1], [0, 0, 1, 1], [], []>} : vector<48x96xbf16>, vector<96x128xbf16>, vector<48x128xf32> -> vector<48x128xf32>
    %c0_3 = arith.constant 0 : index
    %c0_4 = arith.constant 0 : index
    %3 = vector.load %arg3[%c0_3, %c0_4] : memref<1x128xf32, #tpu.memory_space<vmem>>, vector<1x128xf32>
    %4 = vector.broadcast %3 : vector<1x128xf32> to vector<48x128xf32>
    %5 = arith.addf %2, %4 : vector<48x128xf32>
    %cst_5 = arith.constant 0.000000e+00 : f32
    %6 = vector.broadcast %cst_5 : f32 to vector<48x128xf32>
    %7 = arith.maximumf %5, %6 : vector<48x128xf32>
    %cst_6 = arith.constant 1.000000e+00 : f32
    %8 = vector.broadcast %cst_6 : f32 to vector<48x128xf32>
    %9 = arith.addf %7, %8 : vector<48x128xf32>
    %c0_7 = arith.constant 0 : index
    %c0_8 = arith.constant 0 : index
    %10 = vector.load %arg4[%c0_7, %c0_8] : memref<48x128xf32, #tpu.memory_space<vmem>>, vector<48x128xf32>
    tpu.vector_store %arg4[%c0_7, %c0_8], %9 {strides = array<i32>} : memref<48x128xf32, #tpu.memory_space<vmem>>, vector<48x128xf32>,
    return
  }
  func.func @transform_0(%arg0: i32) -> (i32, i32) {
    %c0_i32 = arith.constant 0 : i32
    %c0_i32_0 = arith.constant 0 : i32
    return %arg0, %c0_i32 : i32, i32
  }
  func.func @transform_1(%arg0: i32) -> (i32, i32) {
    %c0_i32 = arith.constant 0 : i32
    %c0_i32_0 = arith.constant 0 : i32
    %c0_i32_1 = arith.constant 0 : i32
    return %c0_i32, %c0_i32_0 : i32, i32
  }
  func.func @transform_2(%arg0: i32) -> (i32, i32) {
    %c0_i32 = arith.constant 0 : i32
    %c0_i32_0 = arith.constant 0 : i32
    %c0_i32_1 = arith.constant 0 : i32
    return %c0_i32, %c0_i32_0 : i32, i32
  }
  func.func @transform_3(%arg0: i32) -> (i32, i32) {
    %c0_i32 = arith.constant 0 : i32
    %c0_i32_0 = arith.constant 0 : i32
    return %arg0, %c0_i32 : i32, i32
  }
}

module attributes {stable_mosaic.version = 11 : i64} {
  func.func @_appnp_fused_kernel(%arg0: memref<96x96xbf16, #tpu.memory_space<vmem>>, %arg1: memref<96x128xf32, #tpu.memory_space<vmem>>, %arg2: memref<96x128xf32, #tpu.memory_space<vmem>>, %arg3: memref<96x128xbf16, #tpu.memory_space<vmem>>) attributes {dimension_semantics = [], scalar_prefetch = 0 : i64, scratch_operands = 1 : i64, tpu.core_type = #tpu.core_type<tc>} {
    %c0 = arith.constant 0 : index
    %c0_0 = arith.constant 0 : index
    %0 = vector.load %arg1[%c0, %c0_0] : memref<96x128xf32, #tpu.memory_space<vmem>>, vector<96x128xf32>
    %1 = arith.truncf %0 : vector<96x128xf32> to vector<96x128xbf16>
    %c0_1 = arith.constant 0 : index
    %c0_2 = arith.constant 0 : index
    %2 = vector.load %arg3[%c0_1, %c0_2] : memref<96x128xbf16, #tpu.memory_space<vmem>>, vector<96x128xbf16>
    tpu.vector_store %arg3[%c0_1, %c0_2], %1 {strides = array<i32>} : memref<96x128xbf16, #tpu.memory_space<vmem>>, vector<96x128xbf16>,
    %c0_i32 = arith.constant 0 : i32
    %c9_i32 = arith.constant 9 : i32
    %3 = arith.addi %c0_i32, %c9_i32 : i32
    %c1_i32 = arith.constant 1 : i32
    scf.for %arg4 = %c0_i32 to %3 step %c1_i32  : i32 {
      %c0_13 = arith.constant 0 : index
      %c0_14 = arith.constant 0 : index
      %14 = vector.load %arg0[%c0_13, %c0_14] : memref<96x96xbf16, #tpu.memory_space<vmem>>, vector<96x96xbf16>
      %c0_15 = arith.constant 0 : index
      %c0_16 = arith.constant 0 : index
      %15 = vector.load %arg3[%c0_15, %c0_16] : memref<96x128xbf16, #tpu.memory_space<vmem>>, vector<96x128xbf16>
      %cst_17 = arith.constant dense<0.000000e+00> : vector<96x128xf32>
      %16 = tpu.matmul %14, %15, %cst_17 {dimension_numbers = #tpu.dot_dimension_numbers<[1], [0], [0], [1], [0, 0, 1, 1], [], []>} : vector<96x96xbf16>, vector<96x128xbf16>, vector<96x128xf32> -> vector<96x128xf32>
      %cst_18 = arith.constant 0.899999976 : f32
      %17 = vector.broadcast %cst_18 : f32 to vector<96x128xf32>
      %18 = arith.mulf %17, %16 : vector<96x128xf32>
      %c0_19 = arith.constant 0 : index
      %c0_20 = arith.constant 0 : index
      %19 = vector.load %arg1[%c0_19, %c0_20] : memref<96x128xf32, #tpu.memory_space<vmem>>, vector<96x128xf32>
      %cst_21 = arith.constant 1.000000e-01 : f32
      %20 = vector.broadcast %cst_21 : f32 to vector<96x128xf32>
      %21 = arith.mulf %20, %19 : vector<96x128xf32>
      %22 = arith.addf %18, %21 : vector<96x128xf32>
      %23 = arith.truncf %22 : vector<96x128xf32> to vector<96x128xbf16>
      %c0_22 = arith.constant 0 : index
      %c0_23 = arith.constant 0 : index
      %24 = vector.load %arg3[%c0_22, %c0_23] : memref<96x128xbf16, #tpu.memory_space<vmem>>, vector<96x128xbf16>
      tpu.vector_store %arg3[%c0_22, %c0_23], %23 {strides = array<i32>} : memref<96x128xbf16, #tpu.memory_space<vmem>>, vector<96x128xbf16>,
    }
    %c0_3 = arith.constant 0 : index
    %c0_4 = arith.constant 0 : index
    %4 = vector.load %arg0[%c0_3, %c0_4] : memref<96x96xbf16, #tpu.memory_space<vmem>>, vector<96x96xbf16>
    %c0_5 = arith.constant 0 : index
    %c0_6 = arith.constant 0 : index
    %5 = vector.load %arg3[%c0_5, %c0_6] : memref<96x128xbf16, #tpu.memory_space<vmem>>, vector<96x128xbf16>
    %cst = arith.constant dense<0.000000e+00> : vector<96x128xf32>
    %6 = tpu.matmul %4, %5, %cst {dimension_numbers = #tpu.dot_dimension_numbers<[1], [0], [0], [1], [0, 0, 1, 1], [], []>} : vector<96x96xbf16>, vector<96x128xbf16>, vector<96x128xf32> -> vector<96x128xf32>
    %cst_7 = arith.constant 0.899999976 : f32
    %7 = vector.broadcast %cst_7 : f32 to vector<96x128xf32>
    %8 = arith.mulf %7, %6 : vector<96x128xf32>
    %c0_8 = arith.constant 0 : index
    %c0_9 = arith.constant 0 : index
    %9 = vector.load %arg1[%c0_8, %c0_9] : memref<96x128xf32, #tpu.memory_space<vmem>>, vector<96x128xf32>
    %cst_10 = arith.constant 1.000000e-01 : f32
    %10 = vector.broadcast %cst_10 : f32 to vector<96x128xf32>
    %11 = arith.mulf %10, %9 : vector<96x128xf32>
    %12 = arith.addf %8, %11 : vector<96x128xf32>
    %c0_11 = arith.constant 0 : index
    %c0_12 = arith.constant 0 : index
    %13 = vector.load %arg2[%c0_11, %c0_12] : memref<96x128xf32, #tpu.memory_space<vmem>>, vector<96x128xf32>
    tpu.vector_store %arg2[%c0_11, %c0_12], %12 {strides = array<i32>} : memref<96x128xf32, #tpu.memory_space<vmem>>, vector<96x128xf32>,
    return
  }
}

</mosaic_0001>

<llo_original>
// kernel: gcn_net_propagation.4
$region0: #{gcn_net_propagation.4}
  #allocation0 [shape = 'u32[]', space=smem, size = 0x4, offset = 0x4, fixed_abs, tag = 'smem constant byte address 0x4 - core index']
  #allocation1 [shape = 'u32[72,128]{1,0:T(1,128)}', space=vmem, size = 0x9000, scoped, tag = 'internal scratch']
  %s0 = inlined_call_operand.vmem [shape: bf16[96,96], index: 0, kind: input, shape index: {}]
  %s1 = inlined_call_operand.vmem [shape: bf16[96,128], index: 1, kind: input, shape index: {}]
  %s2 = inlined_call_operand.vmem [shape: f32[1,128], index: 2, kind: input, shape index: {}]
  %s3 = inlined_call_operand.vmem [shape: f32[96,128], index: 3, kind: output, shape index: {}]
  %s4 = sld [smem:[#allocation0]]
  $region45: #{gcn_net_propagation.4} parent=0
    _
  %s6 = ssub.s32 1, %s4
  %s7 = scalar_select 0, %s6, %s4
  loop: start=0, step=1, limit=4
  $region2: #{gcn_net_propagation.4} parent=0 // loop_pre_header
    _
  $region3: #{gcn_net_propagation.4} parent=0 // loop_header
    %s9 = sphi 0, %s13
    %p10 = scmp.ge.s32.totalorder %s9, 4
    %s19 = sphi 0, %s21
    %s22 = sphi 0, %s19
    %s23 = sphi 0, %s22
    %s39 = sphi 0, %s23
    %s43 = sphi 0, %s43
    %s45 = sphi 0, %s43
    %s46 = sphi 0, %s45
    %s60 = sphi 0, %s46
    %s64 = sphi 0, %s64
    %s66 = sphi 0, %s64
    %s67 = sphi 0, %s66
    %s81 = sphi 0, %s67
    %s87 = sphi 0, %s89
    %s90 = sphi 0, %s87
    %s91 = sphi 0, %s90
    %s107 = sphi 0, %s91
  $region4: #{gcn_net_propagation.4} parent=0 // loop_header_branch
    %12 = sbr.rel (%p10) target = $region8
  $region5: #{gcn_net_propagation.4} parent=0 // loop_body
    %s14 = ssub.s32 %s9, 1
    %s15 = ssub.s32 %s9, 2
    %s16 = sadd.s32 %s9, 1
    %s17 = ssub.s32 %s9, %s16
    %p18 = scmp.eq.s32.totalorder %s17, 0
    %s20 = sadd.s32 %s19, 1
    %s21 = scalar_select %p18, %s19, %s20
    %p24 = pneg %p18
    %p25 = scmp.eq.s32.totalorder %s9, 1
    %p26 = por %p24, %p25
    %p27 = scmp.ne.s32.totalorder %s19, %s22
    %p28 = scmp.eq.s32.totalorder %s9, 0
    %p29 = por %p27, %p28
    %p30 = scmp.ne.s32.totalorder %s19, %s22
    %p31 = scmp.eq.s32.totalorder %s14, 1
    %p32 = por %p30, %p31
    %p33 = scmp.ne.s32.totalorder %s22, %s23
    %p34 = scmp.eq.s32.totalorder %s14, 0
    %p35 = por %p33, %p34
    %p36 = scmp.ne.s32.totalorder %s22, %s23
    %p37 = scmp.eq.s32.totalorder %s15, 1
    %p38 = por %p36, %p37
    %p40 = scmp.ne.s32.totalorder %s23, %s39
    %p41 = scmp.eq.s32.totalorder %s15, 0
    %p42 = por %p40, %p41
    %s44 = sadd.s32 %s43, 1
    %p47 = scmp.eq.s32.totalorder %s9, 1
    %p48 = scmp.ne.s32.totalorder %s43, %s45
    %p49 = scmp.eq.s32.totalorder %s9, 0
    %p50 = por %p48, %p49
    %p51 = scmp.ne.s32.totalorder %s43, %s45
    %p52 = scmp.eq.s32.totalorder %s14, 1
    %p53 = por %p51, %p52
    %p54 = scmp.ne.s32.totalorder %s45, %s46
    %p55 = scmp.eq.s32.totalorder %s14, 0
    %p56 = por %p54, %p55
    %p57 = scmp.ne.s32.totalorder %s45, %s46
    %p58 = scmp.eq.s32.totalorder %s15, 1
    %p59 = por %p57, %p58
    %p61 = scmp.ne.s32.totalorder %s46, %s60
    %p62 = scmp.eq.s32.totalorder %s15, 0
    %p63 = por %p61, %p62
    %s65 = sadd.s32 %s64, 1
    %p68 = scmp.eq.s32.totalorder %s9, 1
    %p69 = scmp.ne.s32.totalorder %s64, %s66
    %p70 = scmp.eq.s32.totalorder %s9, 0
    %p71 = por %p69, %p70
    %p72 = scmp.ne.s32.totalorder %s64, %s66
    %p73 = scmp.eq.s32.totalorder %s14, 1
    %p74 = por %p72, %p73
    %p75 = scmp.ne.s32.totalorder %s66, %s67
    %p76 = scmp.eq.s32.totalorder %s14, 0
    %p77 = por %p75, %p76
    %p78 = scmp.ne.s32.totalorder %s66, %s67
    %p79 = scmp.eq.s32.totalorder %s15, 1
    %p80 = por %p78, %p79
    %p82 = scmp.ne.s32.totalorder %s67, %s81
    %p83 = scmp.eq.s32.totalorder %s15, 0
    %p84 = por %p82, %p83
    %s85 = ssub.s32 %s9, %s16
    %p86 = scmp.eq.s32.totalorder %s85, 0
    %s88 = sadd.s32 %s87, 1
    %s89 = scalar_select %p86, %s87, %s88
    %p92 = pneg %p86
    %p93 = scmp.eq.s32.totalorder %s9, 1
    %p94 = por %p92, %p93
    %p95 = scmp.ne.s32.totalorder %s87, %s90
    %p96 = scmp.eq.s32.totalorder %s9, 0
    %p97 = por %p95, %p96
    %p98 = scmp.ne.s32.totalorder %s87, %s90
    %p99 = scmp.eq.s32.totalorder %s14, 1
    %p100 = por %p98, %p99
    %p101 = scmp.ne.s32.totalorder %s90, %s91
    %p102 = scmp.eq.s32.totalorder %s14, 0
    %p103 = por %p101, %p102
    %p104 = scmp.ne.s32.totalorder %s90, %s91
    %p105 = scmp.eq.s32.totalorder %s15, 1
    %p106 = por %p104, %p105
    %p108 = scmp.ne.s32.totalorder %s91, %s107
    %p109 = scmp.eq.s32.totalorder %s15, 0
    %p110 = por %p108, %p109
    %p111 = scmp.le.s32.totalorder 1, %s9
    %p112 = scmp.lt.s32.totalorder %s9, 3
    %p113 = pnand %p111, %p112
    %p114 = pneg %p113
    // Predicated region
    $region9: #{gcn_net_propagation.4} parent=5 // pred_check
      _
    $region10: #{gcn_net_propagation.4} parent=5 // pred_check_branch
      %116 = sbr.rel (%p113) target = $region12
    $region11: #{gcn_net_propagation.4} parent=5 // pred_region
      %s117 = ssub.s32 %s9, 1
      // Predicated region
      $region13: #{gcn_net_propagation.4} parent=11 // pred_check
        %p118 = pneg %p56
      $region14: #{gcn_net_propagation.4} parent=11 // pred_check_branch
        %120 = sbr.rel (%p118) target = $region16
      $region15: #{gcn_net_propagation.4} parent=11 // pred_region
        _
      $region16: #{gcn_net_propagation.4} parent=11 // pred_fallthru
        _
      // Predicated region
      $region17: #{gcn_net_propagation.4} parent=11 // pred_check
        %p121 = pneg %p77
      $region18: #{gcn_net_propagation.4} parent=11 // pred_check_branch
        %123 = sbr.rel (%p121) target = $region20
      $region19: #{gcn_net_propagation.4} parent=11 // pred_region
        _
      $region20: #{gcn_net_propagation.4} parent=11 // pred_fallthru
        _
    $region12: #{gcn_net_propagation.4} parent=5 // pred_fallthru
      _
    %p124 = scmp.lt.s32.totalorder %s9, 2
    // Predicated region
    $region21: #{gcn_net_propagation.4} parent=5 // pred_check
      %p125 = pneg %p124
    $region22: #{gcn_net_propagation.4} parent=5 // pred_check_branch
      %127 = sbr.rel (%p125) target = $region24
    $region23: #{gcn_net_propagation.4} parent=5 // pred_region
      // Predicated region
      $region25: #{gcn_net_propagation.4} parent=23 // pred_check
        %p128 = pneg %p29
      $region26: #{gcn_net_propagation.4} parent=23 // pred_check_branch
        %130 = sbr.rel (%p128) target = $region28
      $region27: #{gcn_net_propagation.4} parent=23 // pred_region
        %s131 = smul.u32 6, %s9
        %p132 = scmp.lt.s32.totalorder %s131, 11
        %s133 = scalar_select %p132, %s131, 11
        %s134 = smul.addr %s133, 4
        %s135 = scalar_lea.vmem %s0, %s134
        %s136 = smul.u32 6, %s9
      $region28: #{gcn_net_propagation.4} parent=23 // pred_fallthru
        _
    $region24: #{gcn_net_propagation.4} parent=5 // pred_fallthru
      _
    %p137 = scmp.le.s32.totalorder 1, %s9
    %p138 = scmp.lt.s32.totalorder %s9, 3
    %p139 = pnand %p137, %p138
    %p140 = pneg %p139
    // Predicated region
    $region29: #{gcn_net_propagation.4} parent=5 // pred_check
      _
    $region30: #{gcn_net_propagation.4} parent=5 // pred_check_branch
      %142 = sbr.rel (%p139) target = $region32
    $region31: #{gcn_net_propagation.4} parent=5 // pred_region
      %s143 = ssub.s32 %s9, 1
      %s144 = smul.u32 6, %s14
      %p145 = scmp.lt.s32.totalorder %s144, 11
      %s146 = scalar_select %p145, %s144, 11
      %s147 = smul.addr %s146, 4
      %s148 = scalar_lea.vmem %s0, %s147
      %p149 = pneg %p35
      %p150 = pneg %p32
      %p151 = pneg %p56
      %p152 = pneg %p53
      %p153 = pneg %p77
      %p154 = pneg %p74
      %p155 = pneg %p103
      %p156 = pneg %p100
      %s157 = smul.u32 6, %s14
      %p158 = scmp.lt.s32.totalorder %s157, 11
      %s159 = scalar_select %p158, %s157, 11
      %s160 = smul.addr %s159, 8
      %s161 = scalar_lea.vmem %s3, %s160
      %s162 = smul.u32 6, %s14
      %p163 = scmp.lt.s32.totalorder %s162, 11
      %s164 = scalar_select %p163, %s162, 11
      %s165 = smul.addr %s164, 4
      %s166 = scalar_lea.vmem %s0, %s165
      %s167 = smul.u32 6, %s14
      %s168 = smul.u32 6, %s14
      %p169 = scmp.lt.s32.totalorder %s168, 11
      %s170 = scalar_select %p169, %s168, 11
      %s171 = smul.addr %s170, 8
      %s172 = scalar_lea.vmem %s3, %s171
      %s173 = smul.u32 6, %s14
      %v175 = vld [vmem:[%s166] sm:$0xf]
      %v176 = vld [vmem:[%s166 + $0x4] sm:$0xf]
      %v177 = vld [vmem:[%s166 + $0x8] sm:$0xf]
      %v178 = vld [vmem:[%s166 + $0xc] sm:$0xf]
      %v179 = vld [vmem:[%s166 + $0x10] sm:$0xf]
      %v180 = vld [vmem:[%s166 + $0x14] sm:$0xf]
      %v181 = vld [vmem:[%s1] sm:$0xf]
      %v182 = vld [vmem:[%s1 + $0x4] sm:$0xf]
      %v183 = vld [vmem:[%s1 + $0x8] sm:$0xf]
      %v184 = vld [vmem:[%s1 + $0xc] sm:$0xf]
      %v185 = vld [vmem:[%s1 + $0x10] sm:$0xf]
      %v186 = vld [vmem:[%s1 + $0x14] sm:$0xf]
      %v187 = vld [vmem:[%s1 + $0x18] sm:$0xf]
      %v188 = vld [vmem:[%s1 + $0x1c] sm:$0xf]
      %v189 = vld [vmem:[%s1 + $0x20] sm:$0xf]
      %v190 = vld [vmem:[%s1 + $0x24] sm:$0xf]
      %v191 = vld [vmem:[%s1 + $0x28] sm:$0xf]
      %v192 = vld [vmem:[%s1 + $0x2c] sm:$0xf]
      %v193 = vld [vmem:[%s2] sm:$0x1]
      %v195 = vperm.slane %v193, 0
      %v203 = vunpack.c.l.b16 %v175
      %v204 = vunpack.c.l.b16 %v176
      %v205 = vunpack.c.l.b16 %v177
      %v206 = vunpack.c.l.b16 %v178
      %v207 = vunpack.c.l.b16 %v179
      %v208 = vunpack.c.l.b16 %v180
      %v209 = vpack.c.b16 %v204, %v203
      %v210 = vpack.c.b16 %v206, %v205
      %v211 = vpack.c.b16 %v208, %v207
      %v224 = vunpack.c.l.b16 %v181
      %v225 = vunpack.c.l.b16 %v182
      %v226 = vunpack.c.l.b16 %v183
      %v227 = vunpack.c.l.b16 %v184
      %v228 = vunpack.c.l.b16 %v185
      %v229 = vunpack.c.l.b16 %v186
      %v230 = vunpack.c.l.b16 %v187
      %v231 = vunpack.c.l.b16 %v188
      %v232 = vunpack.c.l.b16 %v189
      %v233 = vunpack.c.l.b16 %v190
      %v234 = vunpack.c.l.b16 %v191
      %v235 = vunpack.c.l.b16 %v192
      %v236 = vpack.c.b16 %v225, %v224
      %v237 = vpack.c.b16 %v227, %v226
      %v238 = vpack.c.b16 %v229, %v228
      %v239 = vpack.c.b16 %v231, %v230
      %v240 = vpack.c.b16 %v233, %v232
      %v241 = vpack.c.b16 %v235, %v234
      %vm248 = vcmask 785408
      %v250 = vsel %vm248, %v209, 0
      %v253 = vsel %vm248, %v210, 0
      %v256 = vsel %vm248, %v211, 0
      %258 = vmatpush.bf16.msra.mxu0 0
      %259 = vmatpush.bf16.msra.mxu0 0
      %260 = vmatpush.bf16.msra.mxu0 %v241
      %261 = vmatpush.bf16.msra.mxu0 %v240
      %262 = vmatpush.bf16.msra.mxu0 %v239
      %263 = vmatpush.bf16.msra.mxu0 %v238
      %264 = vmatpush.bf16.msra.mxu0 %v237
      %265 = vmatpush.bf16.msra.mxu0 %v236
      %266 = vmatmul.bf16.gmra.mxu0 %v250
      %v267 = vpop.f32.mrf.mxu0
      %v268 = vadd.f32 %v195, %v267
      %v269 = vpop.f32.mrf.mxu0
      %v270 = vadd.f32 %v195, %v269
      %271 = vmatmul.bf16.gmra.mxu0 %v253
      %v272 = vpop.f32.mrf.mxu0
      %v273 = vadd.f32 %v195, %v272
      %v274 = vpop.f32.mrf.mxu0
      %v275 = vadd.f32 %v195, %v274
      %276 = vmatmul.bf16.gmra.mxu0 %v256
      %v277 = vpop.f32.mrf.mxu0
      %v278 = vadd.f32 %v195, %v277
      %v279 = vpop.f32.mrf.mxu0
      %v280 = vadd.f32 %v195, %v279
      %281 = vdwg.mxu0
      %v282 = vmax.f32 %v268, 0.0
      %v283 = vmax.f32 %v270, 0.0
      %v284 = vmax.f32 %v273, 0.0
      %v285 = vmax.f32 %v275, 0.0
      %v286 = vmax.f32 %v278, 0.0
      %v287 = vmax.f32 %v280, 0.0
      %v288 = vadd.f32 %v282, 1.0
      %v289 = vadd.f32 %v283, 1.0
      %v290 = vadd.f32 %v284, 1.0
      %v291 = vadd.f32 %v285, 1.0
      %v292 = vadd.f32 %v286, 1.0
      %v293 = vadd.f32 %v287, 1.0
      %294 = vst [vmem:[%s172] sm:$0xff] %v288
      %295 = vst [vmem:[%s172 + $0x8] sm:$0xff] %v289
      %296 = vst [vmem:[%s172 + $0x10] sm:$0xff] %v290
      %297 = vst [vmem:[%s172 + $0x18] sm:$0xff] %v291
      %298 = vst [vmem:[%s172 + $0x20] sm:$0xff] %v292
      %299 = vst [vmem:[%s172 + $0x28] sm:$0xff] %v293
      %s300 = smul.u32 6, %s14
      %p301 = scmp.lt.s32.totalorder %s300, 11
      %s302 = scalar_select %p301, %s300, 11
      %s303 = smul.addr %s302, 8
      %s304 = scalar_lea.vmem %s3, %s303
      // Predicated region
      $region33: #{gcn_net_propagation.4} parent=31 // pred_check
        %p305 = pneg %p100
      $region34: #{gcn_net_propagation.4} parent=31 // pred_check_branch
        %307 = sbr.rel (%p305) target = $region36
      $region35: #{gcn_net_propagation.4} parent=31 // pred_region
        %s308 = smul.u32 6, %s14
      $region36: #{gcn_net_propagation.4} parent=31 // pred_fallthru
        _
    $region32: #{gcn_net_propagation.4} parent=5 // pred_fallthru
      _
    %p309 = scmp.le.s32.totalorder 2, %s9
    // Predicated region
    $region37: #{gcn_net_propagation.4} parent=5 // pred_check
      %p310 = pneg %p309
    $region38: #{gcn_net_propagation.4} parent=5 // pred_check_branch
      %312 = sbr.rel (%p310) target = $region40
    $region39: #{gcn_net_propagation.4} parent=5 // pred_region
      %s313 = ssub.s32 %s9, 2
      // Predicated region
      $region41: #{gcn_net_propagation.4} parent=39 // pred_check
        %p314 = pneg %p106
      $region42: #{gcn_net_propagation.4} parent=39 // pred_check_branch
        %316 = sbr.rel (%p314) target = $region44
      $region43: #{gcn_net_propagation.4} parent=39 // pred_region
        %s317 = smul.u32 6, %s15
        %p318 = scmp.lt.s32.totalorder %s317, 11
        %s319 = scalar_select %p318, %s317, 11
        %s320 = smul.addr %s319, 8
        %s321 = scalar_lea.vmem %s3, %s320
      $region44: #{gcn_net_propagation.4} parent=39 // pred_fallthru
        _
    $region40: #{gcn_net_propagation.4} parent=5 // pred_fallthru
      _
  $region6: #{gcn_net_propagation.4} parent=0 // loop_footer
    %s13 = sadd.s32 1, %s9
  $region7: #{gcn_net_propagation.4} parent=0 // loop_footer_branch
    %8 = sbr.rel target = $region3
  $region8: #{gcn_net_propagation.4} parent=0 // loop_exit
    _

// kernel: gcn_net_propagation.3
$region0: #{gcn_net_propagation.3}
  #allocation0 [shape = 'u32[]', space=smem, size = 0x4, offset = 0x4, fixed_abs, tag = 'smem constant byte address 0x4 - core index']
  #allocation1 [shape = 'u32[72,128]{1,0:T(1,128)}', space=vmem, size = 0x9000, scoped, tag = 'internal scratch']
  %s0 = inlined_call_operand.vmem [shape: bf16[96,96], index: 0, kind: input, shape index: {}]
  %s1 = inlined_call_operand.vmem [shape: bf16[96,128], index: 1, kind: input, shape index: {}]
  %s2 = inlined_call_operand.vmem [shape: bf16[128,128], index: 2, kind: input, shape index: {}]
  %s3 = inlined_call_operand.vmem [shape: f32[1,128], index: 3, kind: input, shape index: {}]
  %s4 = inlined_call_operand.vmem [shape: bf16[128,128], index: 4, kind: input, shape index: {}]
  %s5 = inlined_call_operand.vmem [shape: bf16[96,128], index: 5, kind: output, shape index: {}]
  %s6 = sld [smem:[#allocation0]]
  $region53: #{gcn_net_propagation.3} parent=0
    _
  %s8 = ssub.s32 1, %s6
  %s9 = scalar_select 0, %s8, %s6
  loop: start=0, step=1, limit=4
  $region2: #{gcn_net_propagation.3} parent=0 // loop_pre_header
    _
  $region3: #{gcn_net_propagation.3} parent=0 // loop_header
    %s11 = sphi 0, %s15
    %p12 = scmp.ge.s32.totalorder %s11, 4
    %s21 = sphi 0, %s23
    %s24 = sphi 0, %s21
    %s25 = sphi 0, %s24
    %s41 = sphi 0, %s25
    %s45 = sphi 0, %s45
    %s47 = sphi 0, %s45
    %s48 = sphi 0, %s47
    %s62 = sphi 0, %s48
    %s66 = sphi 0, %s66
    %s68 = sphi 0, %s66
    %s69 = sphi 0, %s68
    %s83 = sphi 0, %s69
    %s87 = sphi 0, %s87
    %s89 = sphi 0, %s87
    %s90 = sphi 0, %s89
    %s104 = sphi 0, %s90
    %s108 = sphi 0, %s108
    %s110 = sphi 0, %s108
    %s111 = sphi 0, %s110
    %s125 = sphi 0, %s111
    %s131 = sphi 0, %s133
    %s134 = sphi 0, %s131
    %s135 = sphi 0, %s134
    %s151 = sphi 0, %s135
  $region4: #{gcn_net_propagation.3} parent=0 // loop_header_branch
    %14 = sbr.rel (%p12) target = $region8
  $region5: #{gcn_net_propagation.3} parent=0 // loop_body
    %s16 = ssub.s32 %s11, 1
    %s17 = ssub.s32 %s11, 2
    %s18 = sadd.s32 %s11, 1
    %s19 = ssub.s32 %s11, %s18
    %p20 = scmp.eq.s32.totalorder %s19, 0
    %s22 = sadd.s32 %s21, 1
    %s23 = scalar_select %p20, %s21, %s22
    %p26 = pneg %p20
    %p27 = scmp.eq.s32.totalorder %s11, 1
    %p28 = por %p26, %p27
    %p29 = scmp.ne.s32.totalorder %s21, %s24
    %p30 = scmp.eq.s32.totalorder %s11, 0
    %p31 = por %p29, %p30
    %p32 = scmp.ne.s32.totalorder %s21, %s24
    %p33 = scmp.eq.s32.totalorder %s16, 1
    %p34 = por %p32, %p33
    %p35 = scmp.ne.s32.totalorder %s24, %s25
    %p36 = scmp.eq.s32.totalorder %s16, 0
    %p37 = por %p35, %p36
    %p38 = scmp.ne.s32.totalorder %s24, %s25
    %p39 = scmp.eq.s32.totalorder %s17, 1
    %p40 = por %p38, %p39
    %p42 = scmp.ne.s32.totalorder %s25, %s41
    %p43 = scmp.eq.s32.totalorder %s17, 0
    %p44 = por %p42, %p43
    %s46 = sadd.s32 %s45, 1
    %p49 = scmp.eq.s32.totalorder %s11, 1
    %p50 = scmp.ne.s32.totalorder %s45, %s47
    %p51 = scmp.eq.s32.totalorder %s11, 0
    %p52 = por %p50, %p51
    %p53 = scmp.ne.s32.totalorder %s45, %s47
    %p54 = scmp.eq.s32.totalorder %s16, 1
    %p55 = por %p53, %p54
    %p56 = scmp.ne.s32.totalorder %s47, %s48
    %p57 = scmp.eq.s32.totalorder %s16, 0
    %p58 = por %p56, %p57
    %p59 = scmp.ne.s32.totalorder %s47, %s48
    %p60 = scmp.eq.s32.totalorder %s17, 1
    %p61 = por %p59, %p60
    %p63 = scmp.ne.s32.totalorder %s48, %s62
    %p64 = scmp.eq.s32.totalorder %s17, 0
    %p65 = por %p63, %p64
    %s67 = sadd.s32 %s66, 1
    %p70 = scmp.eq.s32.totalorder %s11, 1
    %p71 = scmp.ne.s32.totalorder %s66, %s68
    %p72 = scmp.eq.s32.totalorder %s11, 0
    %p73 = por %p71, %p72
    %p74 = scmp.ne.s32.totalorder %s66, %s68
    %p75 = scmp.eq.s32.totalorder %s16, 1
    %p76 = por %p74, %p75
    %p77 = scmp.ne.s32.totalorder %s68, %s69
    %p78 = scmp.eq.s32.totalorder %s16, 0
    %p79 = por %p77, %p78
    %p80 = scmp.ne.s32.totalorder %s68, %s69
    %p81 = scmp.eq.s32.totalorder %s17, 1
    %p82 = por %p80, %p81
    %p84 = scmp.ne.s32.totalorder %s69, %s83
    %p85 = scmp.eq.s32.totalorder %s17, 0
    %p86 = por %p84, %p85
    %s88 = sadd.s32 %s87, 1
    %p91 = scmp.eq.s32.totalorder %s11, 1
    %p92 = scmp.ne.s32.totalorder %s87, %s89
    %p93 = scmp.eq.s32.totalorder %s11, 0
    %p94 = por %p92, %p93
    %p95 = scmp.ne.s32.totalorder %s87, %s89
    %p96 = scmp.eq.s32.totalorder %s16, 1
    %p97 = por %p95, %p96
    %p98 = scmp.ne.s32.totalorder %s89, %s90
    %p99 = scmp.eq.s32.totalorder %s16, 0
    %p100 = por %p98, %p99
    %p101 = scmp.ne.s32.totalorder %s89, %s90
    %p102 = scmp.eq.s32.totalorder %s17, 1
    %p103 = por %p101, %p102
    %p105 = scmp.ne.s32.totalorder %s90, %s104
    %p106 = scmp.eq.s32.totalorder %s17, 0
    %p107 = por %p105, %p106
    %s109 = sadd.s32 %s108, 1
    %p112 = scmp.eq.s32.totalorder %s11, 1
    %p113 = scmp.ne.s32.totalorder %s108, %s110
    %p114 = scmp.eq.s32.totalorder %s11, 0
    %p115 = por %p113, %p114
    %p116 = scmp.ne.s32.totalorder %s108, %s110
    %p117 = scmp.eq.s32.totalorder %s16, 1
    %p118 = por %p116, %p117
    %p119 = scmp.ne.s32.totalorder %s110, %s111
    %p120 = scmp.eq.s32.totalorder %s16, 0
    %p121 = por %p119, %p120
    %p122 = scmp.ne.s32.totalorder %s110, %s111
    %p123 = scmp.eq.s32.totalorder %s17, 1
    %p124 = por %p122, %p123
    %p126 = scmp.ne.s32.totalorder %s111, %s125
    %p127 = scmp.eq.s32.totalorder %s17, 0
    %p128 = por %p126, %p127
    %s129 = ssub.s32 %s11, %s18
    %p130 = scmp.eq.s32.totalorder %s129, 0
    %s132 = sadd.s32 %s131, 1
    %s133 = scalar_select %p130, %s131, %s132
    %p136 = pneg %p130
    %p137 = scmp.eq.s32.totalorder %s11, 1
    %p138 = por %p136, %p137
    %p139 = scmp.ne.s32.totalorder %s131, %s134
    %p140 = scmp.eq.s32.totalorder %s11, 0
    %p141 = por %p139, %p140
    %p142 = scmp.ne.s32.totalorder %s131, %s134
    %p143 = scmp.eq.s32.totalorder %s16, 1
    %p144 = por %p142, %p143
    %p145 = scmp.ne.s32.totalorder %s134, %s135
    %p146 = scmp.eq.s32.totalorder %s16, 0
    %p147 = por %p145, %p146
    %p148 = scmp.ne.s32.totalorder %s134, %s135
    %p149 = scmp.eq.s32.totalorder %s17, 1
    %p150 = por %p148, %p149
    %p152 = scmp.ne.s32.totalorder %s135, %s151
    %p153 = scmp.eq.s32.totalorder %s17, 0
    %p154 = por %p152, %p153
    %p155 = scmp.le.s32.totalorder 1, %s11
    %p156 = scmp.lt.s32.totalorder %s11, 3
    %p157 = pnand %p155, %p156
    %p158 = pneg %p157
    // Predicated region
    $region9: #{gcn_net_propagation.3} parent=5 // pred_check
      _
    $region10: #{gcn_net_propagation.3} parent=5 // pred_check_branch
      %160 = sbr.rel (%p157) target = $region12
    $region11: #{gcn_net_propagation.3} parent=5 // pred_region
      %s161 = ssub.s32 %s11, 1
      // Predicated region
      $region13: #{gcn_net_propagation.3} parent=11 // pred_check
        %p162 = pneg %p58
      $region14: #{gcn_net_propagation.3} parent=11 // pred_check_branch
        %164 = sbr.rel (%p162) target = $region16
      $region15: #{gcn_net_propagation.3} parent=11 // pred_region
        _
      $region16: #{gcn_net_propagation.3} parent=11 // pred_fallthru
        _
      // Predicated region
      $region17: #{gcn_net_propagation.3} parent=11 // pred_check
        %p165 = pneg %p79
      $region18: #{gcn_net_propagation.3} parent=11 // pred_check_branch
        %167 = sbr.rel (%p165) target = $region20
      $region19: #{gcn_net_propagation.3} parent=11 // pred_region
        _
      $region20: #{gcn_net_propagation.3} parent=11 // pred_fallthru
        _
      // Predicated region
      $region21: #{gcn_net_propagation.3} parent=11 // pred_check
        %p168 = pneg %p100
      $region22: #{gcn_net_propagation.3} parent=11 // pred_check_branch
        %170 = sbr.rel (%p168) target = $region24
      $region23: #{gcn_net_propagation.3} parent=11 // pred_region
        _
      $region24: #{gcn_net_propagation.3} parent=11 // pred_fallthru
        _
      // Predicated region
      $region25: #{gcn_net_propagation.3} parent=11 // pred_check
        %p171 = pneg %p121
      $region26: #{gcn_net_propagation.3} parent=11 // pred_check_branch
        %173 = sbr.rel (%p171) target = $region28
      $region27: #{gcn_net_propagation.3} parent=11 // pred_region
        _
      $region28: #{gcn_net_propagation.3} parent=11 // pred_fallthru
        _
    $region12: #{gcn_net_propagation.3} parent=5 // pred_fallthru
      _
    %p174 = scmp.lt.s32.totalorder %s11, 2
    // Predicated region
    $region29: #{gcn_net_propagation.3} parent=5 // pred_check
      %p175 = pneg %p174
    $region30: #{gcn_net_propagation.3} parent=5 // pred_check_branch
      %177 = sbr.rel (%p175) target = $region32
    $region31: #{gcn_net_propagation.3} parent=5 // pred_region
      // Predicated region
      $region33: #{gcn_net_propagation.3} parent=31 // pred_check
        %p178 = pneg %p31
      $region34: #{gcn_net_propagation.3} parent=31 // pred_check_branch
        %180 = sbr.rel (%p178) target = $region36
      $region35: #{gcn_net_propagation.3} parent=31 // pred_region
        %s181 = smul.u32 6, %s11
        %p182 = scmp.lt.s32.totalorder %s181, 11
        %s183 = scalar_select %p182, %s181, 11
        %s184 = smul.addr %s183, 4
        %s185 = scalar_lea.vmem %s0, %s184
        %s186 = smul.u32 6, %s11
      $region36: #{gcn_net_propagation.3} parent=31 // pred_fallthru
        _
    $region32: #{gcn_net_propagation.3} parent=5 // pred_fallthru
      _
    %p187 = scmp.le.s32.totalorder 1, %s11
    %p188 = scmp.lt.s32.totalorder %s11, 3
    %p189 = pnand %p187, %p188
    %p190 = pneg %p189
    // Predicated region
    $region37: #{gcn_net_propagation.3} parent=5 // pred_check
      _
    $region38: #{gcn_net_propagation.3} parent=5 // pred_check_branch
      %192 = sbr.rel (%p189) target = $region40
    $region39: #{gcn_net_propagation.3} parent=5 // pred_region
      %s193 = ssub.s32 %s11, 1
      %s194 = smul.u32 6, %s16
      %p195 = scmp.lt.s32.totalorder %s194, 11
      %s196 = scalar_select %p195, %s194, 11
      %s197 = smul.addr %s196, 4
      %s198 = scalar_lea.vmem %s0, %s197
      %p199 = pneg %p37
      %p200 = pneg %p34
      %p201 = pneg %p58
      %p202 = pneg %p55
      %p203 = pneg %p79
      %p204 = pneg %p76
      %p205 = pneg %p100
      %p206 = pneg %p97
      %p207 = pneg %p121
      %p208 = pneg %p118
      %p209 = pneg %p147
      %p210 = pneg %p144
      %s211 = smul.u32 6, %s16
      %p212 = scmp.lt.s32.totalorder %s211, 11
      %s213 = scalar_select %p212, %s211, 11
      %s214 = smul.addr %s213, 4
      %s215 = scalar_lea.vmem %s5, %s214
      %s216 = smul.u32 6, %s16
      %p217 = scmp.lt.s32.totalorder %s216, 11
      %s218 = scalar_select %p217, %s216, 11
      %s219 = smul.addr %s218, 4
      %s220 = scalar_lea.vmem %s0, %s219
      %s221 = smul.u32 6, %s16
      %s222 = smul.u32 6, %s16
      %p223 = scmp.lt.s32.totalorder %s222, 11
      %s224 = scalar_select %p223, %s222, 11
      %s225 = smul.addr %s224, 4
      %s226 = scalar_lea.vmem %s5, %s225
      %s227 = smul.u32 6, %s16
      %v229 = vld [vmem:[%s220] sm:$0xf]
      %v230 = vld [vmem:[%s220 + $0x4] sm:$0xf]
      %v231 = vld [vmem:[%s220 + $0x8] sm:$0xf]
      %v232 = vld [vmem:[%s220 + $0xc] sm:$0xf]
      %v233 = vld [vmem:[%s220 + $0x10] sm:$0xf]
      %v234 = vld [vmem:[%s220 + $0x14] sm:$0xf]
      %v235 = vld [vmem:[%s1] sm:$0xf]
      %v236 = vld [vmem:[%s1 + $0x4] sm:$0xf]
      %v237 = vld [vmem:[%s1 + $0x8] sm:$0xf]
      %v238 = vld [vmem:[%s1 + $0xc] sm:$0xf]
      %v239 = vld [vmem:[%s1 + $0x10] sm:$0xf]
      %v240 = vld [vmem:[%s1 + $0x14] sm:$0xf]
      %v241 = vld [vmem:[%s1 + $0x18] sm:$0xf]
      %v242 = vld [vmem:[%s1 + $0x1c] sm:$0xf]
      %v243 = vld [vmem:[%s1 + $0x20] sm:$0xf]
      %v244 = vld [vmem:[%s1 + $0x24] sm:$0xf]
      %v245 = vld [vmem:[%s1 + $0x28] sm:$0xf]
      %v246 = vld [vmem:[%s1 + $0x2c] sm:$0xf]
      %v253 = vunpack.c.l.b16 %v229
      %v254 = vunpack.c.l.b16 %v230
      %v255 = vunpack.c.l.b16 %v231
      %v256 = vunpack.c.l.b16 %v232
      %v257 = vunpack.c.l.b16 %v233
      %v258 = vunpack.c.l.b16 %v234
      %v259 = vpack.c.b16 %v254, %v253
      %v260 = vpack.c.b16 %v256, %v255
      %v261 = vpack.c.b16 %v258, %v257
      %v274 = vunpack.c.l.b16 %v235
      %v275 = vunpack.c.l.b16 %v236
      %v276 = vunpack.c.l.b16 %v237
      %v277 = vunpack.c.l.b16 %v238
      %v278 = vunpack.c.l.b16 %v239
      %v279 = vunpack.c.l.b16 %v240
      %v280 = vunpack.c.l.b16 %v241
      %v281 = vunpack.c.l.b16 %v242
      %v282 = vunpack.c.l.b16 %v243
      %v283 = vunpack.c.l.b16 %v244
      %v284 = vunpack.c.l.b16 %v245
      %v285 = vunpack.c.l.b16 %v246
      %v286 = vpack.c.b16 %v275, %v274
      %v287 = vpack.c.b16 %v277, %v276
      %v288 = vpack.c.b16 %v279, %v278
      %v289 = vpack.c.b16 %v281, %v280
      %v290 = vpack.c.b16 %v283, %v282
      %v291 = vpack.c.b16 %v285, %v284
      %vm298 = vcmask 785408
      %v300 = vsel %vm298, %v259, 0
      %v303 = vsel %vm298, %v260, 0
      %v306 = vsel %vm298, %v261, 0
      %308 = vmatpush.bf16.msra.mxu0 0
      %309 = vmatpush.bf16.msra.mxu0 0
      %310 = vmatpush.bf16.msra.mxu0 %v291
      %311 = vmatpush.bf16.msra.mxu0 %v290
      %312 = vmatpush.bf16.msra.mxu0 %v289
      %313 = vmatpush.bf16.msra.mxu0 %v288
      %314 = vmatpush.bf16.msra.mxu0 %v287
      %315 = vmatpush.bf16.msra.mxu0 %v286
      %316 = vmatmul.bf16.gmra.mxu0 %v300
      %v317 = vpop.f32.mrf.mxu0
      %v318 = vadd.f32 0.0, %v317
      %v319 = vpop.f32.mrf.mxu0
      %v320 = vadd.f32 0.0, %v319
      %321 = vmatmul.bf16.gmra.mxu0 %v303
      %v322 = vpop.f32.mrf.mxu0
      %v323 = vadd.f32 0.0, %v322
      %v324 = vpop.f32.mrf.mxu0
      %v325 = vadd.f32 0.0, %v324
      %326 = vmatmul.bf16.gmra.mxu0 %v306
      %v327 = vpop.f32.mrf.mxu0
      %v328 = vadd.f32 0.0, %v327
      %v329 = vpop.f32.mrf.mxu0
      %v330 = vadd.f32 0.0, %v329
      %331 = vdwg.mxu0
      %v332 = vpack.c.bf16 %v320, %v318
      %v333 = vpack.c.bf16 %v325, %v323
      %v334 = vpack.c.bf16 %v330, %v328
      %v335 = vld [vmem:[%s2] sm:$0xf]
      %v336 = vld [vmem:[%s2 + $0x4] sm:$0xf]
      %v337 = vld [vmem:[%s2 + $0x8] sm:$0xf]
      %v338 = vld [vmem:[%s2 + $0xc] sm:$0xf]
      %v339 = vld [vmem:[%s2 + $0x10] sm:$0xf]
      %v340 = vld [vmem:[%s2 + $0x14] sm:$0xf]
      %v341 = vld [vmem:[%s2 + $0x18] sm:$0xf]
      %v342 = vld [vmem:[%s2 + $0x1c] sm:$0xf]
      %v343 = vld [vmem:[%s2 + $0x20] sm:$0xf]
      %v344 = vld [vmem:[%s2 + $0x24] sm:$0xf]
      %v345 = vld [vmem:[%s2 + $0x28] sm:$0xf]
      %v346 = vld [vmem:[%s2 + $0x2c] sm:$0xf]
      %v347 = vld [vmem:[%s2 + $0x30] sm:$0xf]
      %v348 = vld [vmem:[%s2 + $0x34] sm:$0xf]
      %v349 = vld [vmem:[%s2 + $0x38] sm:$0xf]
      %v350 = vld [vmem:[%s2 + $0x3c] sm:$0xf]
      %v351 = vld [vmem:[%s3] sm:$0x1]
      %v353 = vperm.slane %v351, 0
      %v371 = vunpack.c.l.b16 %v335
      %v372 = vunpack.c.l.b16 %v336
      %v373 = vunpack.c.l.b16 %v337
      %v374 = vunpack.c.l.b16 %v338
      %v375 = vunpack.c.l.b16 %v339
      %v376 = vunpack.c.l.b16 %v340
      %v377 = vunpack.c.l.b16 %v341
      %v378 = vunpack.c.l.b16 %v342
      %v379 = vunpack.c.l.b16 %v343
      %v380 = vunpack.c.l.b16 %v344
      %v381 = vunpack.c.l.b16 %v345
      %v382 = vunpack.c.l.b16 %v346
      %v383 = vunpack.c.l.b16 %v347
      %v384 = vunpack.c.l.b16 %v348
      %v385 = vunpack.c.l.b16 %v349
      %v386 = vunpack.c.l.b16 %v350
      %v387 = vpack.c.b16 %v372, %v371
      %v388 = vpack.c.b16 %v374, %v373
      %v389 = vpack.c.b16 %v376, %v375
      %v390 = vpack.c.b16 %v378, %v377
      %v391 = vpack.c.b16 %v380, %v379
      %v392 = vpack.c.b16 %v382, %v381
      %v393 = vpack.c.b16 %v384, %v383
      %v394 = vpack.c.b16 %v386, %v385
      %403 = vmatpush.bf16.msra.mxu0 %v394
      %404 = vmatpush.bf16.msra.mxu0 %v393
      %405 = vmatpush.bf16.msra.mxu0 %v392
      %406 = vmatpush.bf16.msra.mxu0 %v391
      %407 = vmatpush.bf16.msra.mxu0 %v390
      %408 = vmatpush.bf16.msra.mxu0 %v389
      %409 = vmatpush.bf16.msra.mxu0 %v388
      %410 = vmatpush.bf16.msra.mxu0 %v387
      %411 = vmatmul.bf16.gmra.mxu0 %v332
      %v412 = vpop.f32.mrf.mxu0
      %v413 = vadd.f32 %v353, %v412
      %v414 = vpop.f32.mrf.mxu0
      %v415 = vadd.f32 %v353, %v414
      %416 = vmatmul.bf16.gmra.mxu0 %v333
      %v417 = vpop.f32.mrf.mxu0
      %v418 = vadd.f32 %v353, %v417
      %v419 = vpop.f32.mrf.mxu0
      %v420 = vadd.f32 %v353, %v419
      %421 = vmatmul.bf16.gmra.mxu0 %v334
      %v422 = vpop.f32.mrf.mxu0
      %v423 = vadd.f32 %v353, %v422
      %v424 = vpop.f32.mrf.mxu0
      %v425 = vadd.f32 %v353, %v424
      %426 = vdwg.mxu0
      %v427 = vmax.f32 %v413, 0.0
      %v428 = vmax.f32 %v415, 0.0
      %v429 = vmax.f32 %v418, 0.0
      %v430 = vmax.f32 %v420, 0.0
      %v431 = vmax.f32 %v423, 0.0
      %v432 = vmax.f32 %v425, 0.0
      %v433 = vpack.c.bf16 %v428, %v427
      %v434 = vpack.c.bf16 %v430, %v429
      %v435 = vpack.c.bf16 %v432, %v431
      %v436 = vld [vmem:[%s4] sm:$0xf]
      %v437 = vld [vmem:[%s4 + $0x4] sm:$0xf]
      %v438 = vld [vmem:[%s4 + $0x8] sm:$0xf]
      %v439 = vld [vmem:[%s4 + $0xc] sm:$0xf]
      %v440 = vld [vmem:[%s4 + $0x10] sm:$0xf]
      %v441 = vld [vmem:[%s4 + $0x14] sm:$0xf]
      %v442 = vld [vmem:[%s4 + $0x18] sm:$0xf]
      %v443 = vld [vmem:[%s4 + $0x1c] sm:$0xf]
      %v444 = vld [vmem:[%s4 + $0x20] sm:$0xf]
      %v445 = vld [vmem:[%s4 + $0x24] sm:$0xf]
      %v446 = vld [vmem:[%s4 + $0x28] sm:$0xf]
      %v447 = vld [vmem:[%s4 + $0x2c] sm:$0xf]
      %v448 = vld [vmem:[%s4 + $0x30] sm:$0xf]
      %v449 = vld [vmem:[%s4 + $0x34] sm:$0xf]
      %v450 = vld [vmem:[%s4 + $0x38] sm:$0xf]
      %v451 = vld [vmem:[%s4 + $0x3c] sm:$0xf]
      %v468 = vunpack.c.l.b16 %v436
      %v469 = vunpack.c.l.b16 %v437
      %v470 = vunpack.c.l.b16 %v438
      %v471 = vunpack.c.l.b16 %v439
      %v472 = vunpack.c.l.b16 %v440
      %v473 = vunpack.c.l.b16 %v441
      %v474 = vunpack.c.l.b16 %v442
      %v475 = vunpack.c.l.b16 %v443
      %v476 = vunpack.c.l.b16 %v444
      %v477 = vunpack.c.l.b16 %v445
      %v478 = vunpack.c.l.b16 %v446
      %v479 = vunpack.c.l.b16 %v447
      %v480 = vunpack.c.l.b16 %v448
      %v481 = vunpack.c.l.b16 %v449
      %v482 = vunpack.c.l.b16 %v450
      %v483 = vunpack.c.l.b16 %v451
      %v484 = vpack.c.b16 %v469, %v468
      %v485 = vpack.c.b16 %v471, %v470
      %v486 = vpack.c.b16 %v473, %v472
      %v487 = vpack.c.b16 %v475, %v474
      %v488 = vpack.c.b16 %v477, %v476
      %v489 = vpack.c.b16 %v479, %v478
      %v490 = vpack.c.b16 %v481, %v480
      %v491 = vpack.c.b16 %v483, %v482
      %500 = vmatpush.bf16.msra.mxu0 %v491
      %501 = vmatpush.bf16.msra.mxu0 %v490
      %502 = vmatpush.bf16.msra.mxu0 %v489
      %503 = vmatpush.bf16.msra.mxu0 %v488
      %504 = vmatpush.bf16.msra.mxu0 %v487
      %505 = vmatpush.bf16.msra.mxu0 %v486
      %506 = vmatpush.bf16.msra.mxu0 %v485
      %507 = vmatpush.bf16.msra.mxu0 %v484
      %508 = vmatmul.bf16.gmra.mxu0 %v433
      %v509 = vpop.f32.mrf.mxu0
      %v510 = vadd.f32 0.0, %v509
      %v511 = vpop.f32.mrf.mxu0
      %v512 = vadd.f32 0.0, %v511
      %513 = vmatmul.bf16.gmra.mxu0 %v434
      %v514 = vpop.f32.mrf.mxu0
      %v515 = vadd.f32 0.0, %v514
      %v516 = vpop.f32.mrf.mxu0
      %v517 = vadd.f32 0.0, %v516
      %518 = vmatmul.bf16.gmra.mxu0 %v435
      %v519 = vpop.f32.mrf.mxu0
      %v520 = vadd.f32 0.0, %v519
      %v521 = vpop.f32.mrf.mxu0
      %v522 = vadd.f32 0.0, %v521
      %523 = vdwg.mxu0
      %v524 = vpack.c.bf16 %v510, %v510
      %v525 = vpack.c.bf16 %v512, %v512
      %v526 = vpack.c.bf16 %v515, %v515
      %v527 = vpack.c.bf16 %v517, %v517
      %v528 = vpack.c.bf16 %v520, %v520
      %v529 = vpack.c.bf16 %v522, %v522
      %530 = vst [vmem:[%s226] sm:$0xf] %v524
      %531 = vst [vmem:[%s226 + $0x4] sm:$0xf] %v525
      %532 = vst [vmem:[%s226 + $0x8] sm:$0xf] %v526
      %533 = vst [vmem:[%s226 + $0xc] sm:$0xf] %v527
      %534 = vst [vmem:[%s226 + $0x10] sm:$0xf] %v528
      %535 = vst [vmem:[%s226 + $0x14] sm:$0xf] %v529
      %s536 = smul.u32 6, %s16
      %p537 = scmp.lt.s32.totalorder %s536, 11
      %s538 = scalar_select %p537, %s536, 11
      %s539 = smul.addr %s538, 4
      %s540 = scalar_lea.vmem %s5, %s539
      // Predicated region
      $region41: #{gcn_net_propagation.3} parent=39 // pred_check
        %p541 = pneg %p144
      $region42: #{gcn_net_propagation.3} parent=39 // pred_check_branch
        %543 = sbr.rel (%p541) target = $region44
      $region43: #{gcn_net_propagation.3} parent=39 // pred_region
        %s544 = smul.u32 6, %s16
      $region44: #{gcn_net_propagation.3} parent=39 // pred_fallthru
        _
    $region40: #{gcn_net_propagation.3} parent=5 // pred_fallthru
      _
    %p545 = scmp.le.s32.totalorder 2, %s11
    // Predicated region
    $region45: #{gcn_net_propagation.3} parent=5 // pred_check
      %p546 = pneg %p545
    $region46: #{gcn_net_propagation.3} parent=5 // pred_check_branch
      %548 = sbr.rel (%p546) target = $region48
    $region47: #{gcn_net_propagation.3} parent=5 // pred_region
      %s549 = ssub.s32 %s11, 2
      // Predicated region
      $region49: #{gcn_net_propagation.3} parent=47 // pred_check
        %p550 = pneg %p150
      $region50: #{gcn_net_propagation.3} parent=47 // pred_check_branch
        %552 = sbr.rel (%p550) target = $region52
      $region51: #{gcn_net_propagation.3} parent=47 // pred_region
        %s553 = smul.u32 6, %s17
        %p554 = scmp.lt.s32.totalorder %s553, 11
        %s555 = scalar_select %p554, %s553, 11
        %s556 = smul.addr %s555, 4
        %s557 = scalar_lea.vmem %s5, %s556
      $region52: #{gcn_net_propagation.3} parent=47 // pred_fallthru
        _
    $region48: #{gcn_net_propagation.3} parent=5 // pred_fallthru
      _
  $region6: #{gcn_net_propagation.3} parent=0 // loop_footer
    %s15 = sadd.s32 1, %s11
  $region7: #{gcn_net_propagation.3} parent=0 // loop_footer_branch
    %10 = sbr.rel target = $region3
  $region8: #{gcn_net_propagation.3} parent=0 // loop_exit
    _

// kernel: gcn_net_propagation.5
$region0: #{gcn_net_propagation.5}
  #allocation0 [shape = 'u32[]', space=smem, size = 0x4, offset = 0x4, fixed_abs, tag = 'smem constant byte address 0x4 - core index']
  #allocation1 [shape = 'u32[72,128]{1,0:T(1,128)}', space=vmem, size = 0x9000, scoped, tag = 'internal scratch']
  #allocation2 [shape = 'bf16[96,128]{1,0:T(8,128)(2,1)}', space=vmem, size = 0x6000, scoped, tag = 'scratch operand']
  %s0 = inlined_call_operand.vmem [shape: bf16[96,96], index: 0, kind: input, shape index: {}]
  %s1 = inlined_call_operand.vmem [shape: f32[96,128], index: 1, kind: input, shape index: {}]
  %s2 = inlined_call_operand.vmem [shape: f32[96,128], index: 2, kind: output, shape index: {}]
  %s3 = sld [smem:[#allocation0]]
  $region25: #{gcn_net_propagation.5} parent=0
    _
  %s5 = ssub.s32 1, %s3
  %s6 = scalar_select 0, %s5, %s3
  // Predicated region
  $region2: #{gcn_net_propagation.5} parent=0 // pred_check
    _
  $region3: #{gcn_net_propagation.5} parent=0 // pred_check_branch
    %8 = sbr.rel (0) target = $region5
  $region4: #{gcn_net_propagation.5} parent=0 // pred_region
    _
  $region5: #{gcn_net_propagation.5} parent=0 // pred_fallthru
    _
  // Predicated region
  $region6: #{gcn_net_propagation.5} parent=0 // pred_check
    _
  $region7: #{gcn_net_propagation.5} parent=0 // pred_check_branch
    %10 = sbr.rel (0) target = $region9
  $region8: #{gcn_net_propagation.5} parent=0 // pred_region
    _
  $region9: #{gcn_net_propagation.5} parent=0 // pred_fallthru
    _
  %v12 = vld [vmem:[%s1] sm:$0xff]
  %v13 = vld [vmem:[%s1 + $0x8] sm:$0xff]
  %v14 = vld [vmem:[%s1 + $0x10] sm:$0xff]
  %v15 = vld [vmem:[%s1 + $0x18] sm:$0xff]
  %v16 = vld [vmem:[%s1 + $0x20] sm:$0xff]
  %v17 = vld [vmem:[%s1 + $0x28] sm:$0xff]
  %v18 = vld [vmem:[%s1 + $0x30] sm:$0xff]
  %v19 = vld [vmem:[%s1 + $0x38] sm:$0xff]
  %v20 = vld [vmem:[%s1 + $0x40] sm:$0xff]
  %v21 = vld [vmem:[%s1 + $0x48] sm:$0xff]
  %v22 = vld [vmem:[%s1 + $0x50] sm:$0xff]
  %v23 = vld [vmem:[%s1 + $0x58] sm:$0xff]
  %v24 = vpack.c.bf16 %v12, %v12
  %v25 = vpack.c.bf16 %v13, %v13
  %v26 = vpack.c.bf16 %v14, %v14
  %v27 = vpack.c.bf16 %v15, %v15
  %v28 = vpack.c.bf16 %v16, %v16
  %v29 = vpack.c.bf16 %v17, %v17
  %v30 = vpack.c.bf16 %v18, %v18
  %v31 = vpack.c.bf16 %v19, %v19
  %v32 = vpack.c.bf16 %v20, %v20
  %v33 = vpack.c.bf16 %v21, %v21
  %v34 = vpack.c.bf16 %v22, %v22
  %v35 = vpack.c.bf16 %v23, %v23
  %36 = vst [vmem:[#allocation2] sm:$0xf] %v24
  %37 = vst [vmem:[#allocation2 + $0x4] sm:$0xf] %v25
  %38 = vst [vmem:[#allocation2 + $0x8] sm:$0xf] %v26
  %39 = vst [vmem:[#allocation2 + $0xc] sm:$0xf] %v27
  %40 = vst [vmem:[#allocation2 + $0x10] sm:$0xf] %v28
  %41 = vst [vmem:[#allocation2 + $0x14] sm:$0xf] %v29
  %42 = vst [vmem:[#allocation2 + $0x18] sm:$0xf] %v30
  %43 = vst [vmem:[#allocation2 + $0x1c] sm:$0xf] %v31
  %44 = vst [vmem:[#allocation2 + $0x20] sm:$0xf] %v32
  %45 = vst [vmem:[#allocation2 + $0x24] sm:$0xf] %v33
  %46 = vst [vmem:[#allocation2 + $0x28] sm:$0xf] %v34
  %47 = vst [vmem:[#allocation2 + $0x2c] sm:$0xf] %v35
  loop: start=0, step=1, limit=9
  $region10: #{gcn_net_propagation.5} parent=0 // loop_pre_header
    _
  $region11: #{gcn_net_propagation.5} parent=0 // loop_header
    %s49 = sphi 0, %s53
    %p50 = scmp.ge.s32.totalorder %s49, 9
  $region12: #{gcn_net_propagation.5} parent=0 // loop_header_branch
    %52 = sbr.rel (%p50) target = $region16
  $region13: #{gcn_net_propagation.5} parent=0 // loop_body
    %v54 = vld [vmem:[%s0] sm:$0xf]
    %v55 = vld [vmem:[%s0 + $0x4] sm:$0xf]
    %v56 = vld [vmem:[%s0 + $0x8] sm:$0xf]
    %v57 = vld [vmem:[%s0 + $0xc] sm:$0xf]
    %v58 = vld [vmem:[%s0 + $0x10] sm:$0xf]
    %v59 = vld [vmem:[%s0 + $0x14] sm:$0xf]
    %v60 = vld [vmem:[%s0 + $0x18] sm:$0xf]
    %v61 = vld [vmem:[%s0 + $0x1c] sm:$0xf]
    %v62 = vld [vmem:[%s0 + $0x20] sm:$0xf]
    %v63 = vld [vmem:[%s0 + $0x24] sm:$0xf]
    %v64 = vld [vmem:[%s0 + $0x28] sm:$0xf]
    %v65 = vld [vmem:[%s0 + $0x2c] sm:$0xf]
    %v66 = vld [vmem:[#allocation2] sm:$0xf]
    %v67 = vld [vmem:[#allocation2 + $0x4] sm:$0xf]
    %v68 = vld [vmem:[#allocation2 + $0x8] sm:$0xf]
    %v69 = vld [vmem:[#allocation2 + $0xc] sm:$0xf]
    %v70 = vld [vmem:[#allocation2 + $0x10] sm:$0xf]
    %v71 = vld [vmem:[#allocation2 + $0x14] sm:$0xf]
    %v72 = vld [vmem:[#allocation2 + $0x18] sm:$0xf]
    %v73 = vld [vmem:[#allocation2 + $0x1c] sm:$0xf]
    %v74 = vld [vmem:[#allocation2 + $0x20] sm:$0xf]
    %v75 = vld [vmem:[#allocation2 + $0x24] sm:$0xf]
    %v76 = vld [vmem:[#allocation2 + $0x28] sm:$0xf]
    %v77 = vld [vmem:[#allocation2 + $0x2c] sm:$0xf]
    %v90 = vunpack.c.l.b16 %v54
    %v91 = vunpack.c.l.b16 %v55
    %v92 = vunpack.c.l.b16 %v56
    %v93 = vunpack.c.l.b16 %v57
    %v94 = vunpack.c.l.b16 %v58
    %v95 = vunpack.c.l.b16 %v59
    %v96 = vunpack.c.l.b16 %v60
    %v97 = vunpack.c.l.b16 %v61
    %v98 = vunpack.c.l.b16 %v62
    %v99 = vunpack.c.l.b16 %v63
    %v100 = vunpack.c.l.b16 %v64
    %v101 = vunpack.c.l.b16 %v65
    %v102 = vpack.c.b16 %v91, %v90
    %v103 = vpack.c.b16 %v93, %v92
    %v104 = vpack.c.b16 %v95, %v94
    %v105 = vpack.c.b16 %v97, %v96
    %v106 = vpack.c.b16 %v99, %v98
    %v107 = vpack.c.b16 %v101, %v100
    %v120 = vunpack.c.l.b16 %v66
    %v121 = vunpack.c.l.b16 %v67
    %v122 = vunpack.c.l.b16 %v68
    %v123 = vunpack.c.l.b16 %v69
    %v124 = vunpack.c.l.b16 %v70
    %v125 = vunpack.c.l.b16 %v71
    %v126 = vunpack.c.l.b16 %v72
    %v127 = vunpack.c.l.b16 %v73
    %v128 = vunpack.c.l.b16 %v74
    %v129 = vunpack.c.l.b16 %v75
    %v130 = vunpack.c.l.b16 %v76
    %v131 = vunpack.c.l.b16 %v77
    %v132 = vpack.c.b16 %v121, %v120
    %v133 = vpack.c.b16 %v123, %v122
    %v134 = vpack.c.b16 %v125, %v124
    %v135 = vpack.c.b16 %v127, %v126
    %v136 = vpack.c.b16 %v129, %v128
    %v137 = vpack.c.b16 %v131, %v130
    %vm144 = vcmask 785408
    %v146 = vsel %vm144, %v102, 0
    %v149 = vsel %vm144, %v103, 0
    %v152 = vsel %vm144, %v104, 0
    %v155 = vsel %vm144, %v105, 0
    %v158 = vsel %vm144, %v106, 0
    %v161 = vsel %vm144, %v107, 0
    %163 = vmatpush.bf16.msra.mxu0 0
    %164 = vmatpush.bf16.msra.mxu0 0
    %165 = vmatpush.bf16.msra.mxu0 %v137
    %166 = vmatpush.bf16.msra.mxu0 %v136
    %167 = vmatpush.bf16.msra.mxu0 %v135
    %168 = vmatpush.bf16.msra.mxu0 %v134
    %169 = vmatpush.bf16.msra.mxu0 %v133
    %170 = vmatpush.bf16.msra.mxu0 %v132
    %171 = vmatmul.bf16.gmra.mxu0 %v146
    %v172 = vpop.f32.mrf.mxu0
    %v173 = vadd.f32 0.0, %v172
    %v174 = vpop.f32.mrf.mxu0
    %v175 = vadd.f32 0.0, %v174
    %176 = vmatmul.bf16.gmra.mxu0 %v149
    %v177 = vpop.f32.mrf.mxu0
    %v178 = vadd.f32 0.0, %v177
    %v179 = vpop.f32.mrf.mxu0
    %v180 = vadd.f32 0.0, %v179
    %181 = vmatmul.bf16.gmra.mxu0 %v152
    %v182 = vpop.f32.mrf.mxu0
    %v183 = vadd.f32 0.0, %v182
    %v184 = vpop.f32.mrf.mxu0
    %v185 = vadd.f32 0.0, %v184
    %186 = vmatmul.bf16.gmra.mxu0 %v155
    %v187 = vpop.f32.mrf.mxu0
    %v188 = vadd.f32 0.0, %v187
    %v189 = vpop.f32.mrf.mxu0
    %v190 = vadd.f32 0.0, %v189
    %191 = vmatmul.bf16.gmra.mxu0 %v158
    %v192 = vpop.f32.mrf.mxu0
    %v193 = vadd.f32 0.0, %v192
    %v194 = vpop.f32.mrf.mxu0
    %v195 = vadd.f32 0.0, %v194
    %196 = vmatmul.bf16.gmra.mxu0 %v161
    %v197 = vpop.f32.mrf.mxu0
    %v198 = vadd.f32 0.0, %v197
    %v199 = vpop.f32.mrf.mxu0
    %v200 = vadd.f32 0.0, %v199
    %201 = vdwg.mxu0
    %v202 = vmul.f32 %v173, 0.9
    %v203 = vmul.f32 %v175, 0.9
    %v204 = vmul.f32 %v178, 0.9
    %v205 = vmul.f32 %v180, 0.9
    %v206 = vmul.f32 %v183, 0.9
    %v207 = vmul.f32 %v185, 0.9
    %v208 = vmul.f32 %v188, 0.9
    %v209 = vmul.f32 %v190, 0.9
    %v210 = vmul.f32 %v193, 0.9
    %v211 = vmul.f32 %v195, 0.9
    %v212 = vmul.f32 %v198, 0.9
    %v213 = vmul.f32 %v200, 0.9
    %v214 = vld [vmem:[%s1] sm:$0xff]
    %v215 = vld [vmem:[%s1 + $0x8] sm:$0xff]
    %v216 = vld [vmem:[%s1 + $0x10] sm:$0xff]
    %v217 = vld [vmem:[%s1 + $0x18] sm:$0xff]
    %v218 = vld [vmem:[%s1 + $0x20] sm:$0xff]
    %v219 = vld [vmem:[%s1 + $0x28] sm:$0xff]
    %v220 = vld [vmem:[%s1 + $0x30] sm:$0xff]
    %v221 = vld [vmem:[%s1 + $0x38] sm:$0xff]
    %v222 = vld [vmem:[%s1 + $0x40] sm:$0xff]
    %v223 = vld [vmem:[%s1 + $0x48] sm:$0xff]
    %v224 = vld [vmem:[%s1 + $0x50] sm:$0xff]
    %v225 = vld [vmem:[%s1 + $0x58] sm:$0xff]
    %v226 = vmul.f32 %v214, 0.1
    %v227 = vmul.f32 %v215, 0.1
    %v228 = vmul.f32 %v216, 0.1
    %v229 = vmul.f32 %v217, 0.1
    %v230 = vmul.f32 %v218, 0.1
    %v231 = vmul.f32 %v219, 0.1
    %v232 = vmul.f32 %v220, 0.1
    %v233 = vmul.f32 %v221, 0.1
    %v234 = vmul.f32 %v222, 0.1
    %v235 = vmul.f32 %v223, 0.1
    %v236 = vmul.f32 %v224, 0.1
    %v237 = vmul.f32 %v225, 0.1
    %v238 = vadd.f32 %v202, %v226
    %v239 = vadd.f32 %v203, %v227
    %v240 = vadd.f32 %v204, %v228
    %v241 = vadd.f32 %v205, %v229
    %v242 = vadd.f32 %v206, %v230
    %v243 = vadd.f32 %v207, %v231
    %v244 = vadd.f32 %v208, %v232
    %v245 = vadd.f32 %v209, %v233
    %v246 = vadd.f32 %v210, %v234
    %v247 = vadd.f32 %v211, %v235
    %v248 = vadd.f32 %v212, %v236
    %v249 = vadd.f32 %v213, %v237
    %v250 = vpack.c.bf16 %v238, %v238
    %v251 = vpack.c.bf16 %v239, %v239
    %v252 = vpack.c.bf16 %v240, %v240
    %v253 = vpack.c.bf16 %v241, %v241
    %v254 = vpack.c.bf16 %v242, %v242
    %v255 = vpack.c.bf16 %v243, %v243
    %v256 = vpack.c.bf16 %v244, %v244
    %v257 = vpack.c.bf16 %v245, %v245
    %v258 = vpack.c.bf16 %v246, %v246
    %v259 = vpack.c.bf16 %v247, %v247
    %v260 = vpack.c.bf16 %v248, %v248
    %v261 = vpack.c.bf16 %v249, %v249
    %262 = vst [vmem:[#allocation2] sm:$0xf] %v250
    %263 = vst [vmem:[#allocation2 + $0x4] sm:$0xf] %v251
    %264 = vst [vmem:[#allocation2 + $0x8] sm:$0xf] %v252
    %265 = vst [vmem:[#allocation2 + $0xc] sm:$0xf] %v253
    %266 = vst [vmem:[#allocation2 + $0x10] sm:$0xf] %v254
    %267 = vst [vmem:[#allocation2 + $0x14] sm:$0xf] %v255
    %268 = vst [vmem:[#allocation2 + $0x18] sm:$0xf] %v256
    %269 = vst [vmem:[#allocation2 + $0x1c] sm:$0xf] %v257
    %270 = vst [vmem:[#allocation2 + $0x20] sm:$0xf] %v258
    %271 = vst [vmem:[#allocation2 + $0x24] sm:$0xf] %v259
    %272 = vst [vmem:[#allocation2 + $0x28] sm:$0xf] %v260
    %273 = vst [vmem:[#allocation2 + $0x2c] sm:$0xf] %v261
  $region14: #{gcn_net_propagation.5} parent=0 // loop_footer
    %s53 = sadd.s32 1, %s49
  $region15: #{gcn_net_propagation.5} parent=0 // loop_footer_branch
    %48 = sbr.rel target = $region11
  $region16: #{gcn_net_propagation.5} parent=0 // loop_exit
    _
  %v274 = vld [vmem:[%s0] sm:$0xf]
  %v275 = vld [vmem:[%s0 + $0x4] sm:$0xf]
  %v276 = vld [vmem:[%s0 + $0x8] sm:$0xf]
  %v277 = vld [vmem:[%s0 + $0xc] sm:$0xf]
  %v278 = vld [vmem:[%s0 + $0x10] sm:$0xf]
  %v279 = vld [vmem:[%s0 + $0x14] sm:$0xf]
  %v280 = vld [vmem:[%s0 + $0x18] sm:$0xf]
  %v281 = vld [vmem:[%s0 + $0x1c] sm:$0xf]
  %v282 = vld [vmem:[%s0 + $0x20] sm:$0xf]
  %v283 = vld [vmem:[%s0 + $0x24] sm:$0xf]
  %v284 = vld [vmem:[%s0 + $0x28] sm:$0xf]
  %v285 = vld [vmem:[%s0 + $0x2c] sm:$0xf]
  %v286 = vld [vmem:[#allocation2] sm:$0xf]
  %v287 = vld [vmem:[#allocation2 + $0x4] sm:$0xf]
  %v288 = vld [vmem:[#allocation2 + $0x8] sm:$0xf]
  %v289 = vld [vmem:[#allocation2 + $0xc] sm:$0xf]
  %v290 = vld [vmem:[#allocation2 + $0x10] sm:$0xf]
  %v291 = vld [vmem:[#allocation2 + $0x14] sm:$0xf]
  %v292 = vld [vmem:[#allocation2 + $0x18] sm:$0xf]
  %v293 = vld [vmem:[#allocation2 + $0x1c] sm:$0xf]
  %v294 = vld [vmem:[#allocation2 + $0x20] sm:$0xf]
  %v295 = vld [vmem:[#allocation2 + $0x24] sm:$0xf]
  %v296 = vld [vmem:[#allocation2 + $0x28] sm:$0xf]
  %v297 = vld [vmem:[#allocation2 + $0x2c] sm:$0xf]
  %v310 = vunpack.c.l.b16 %v274
  %v311 = vunpack.c.l.b16 %v275
  %v312 = vunpack.c.l.b16 %v276
  %v313 = vunpack.c.l.b16 %v277
  %v314 = vunpack.c.l.b16 %v278
  %v315 = vunpack.c.l.b16 %v279
  %v316 = vunpack.c.l.b16 %v280
  %v317 = vunpack.c.l.b16 %v281
  %v318 = vunpack.c.l.b16 %v282
  %v319 = vunpack.c.l.b16 %v283
  %v320 = vunpack.c.l.b16 %v284
  %v321 = vunpack.c.l.b16 %v285
  %v322 = vpack.c.b16 %v311, %v310
  %v323 = vpack.c.b16 %v313, %v312
  %v324 = vpack.c.b16 %v315, %v314
  %v325 = vpack.c.b16 %v317, %v316
  %v326 = vpack.c.b16 %v319, %v318
  %v327 = vpack.c.b16 %v321, %v320
  %v340 = vunpack.c.l.b16 %v286
  %v341 = vunpack.c.l.b16 %v287
  %v342 = vunpack.c.l.b16 %v288
  %v343 = vunpack.c.l.b16 %v289
  %v344 = vunpack.c.l.b16 %v290
  %v345 = vunpack.c.l.b16 %v291
  %v346 = vunpack.c.l.b16 %v292
  %v347 = vunpack.c.l.b16 %v293
  %v348 = vunpack.c.l.b16 %v294
  %v349 = vunpack.c.l.b16 %v295
  %v350 = vunpack.c.l.b16 %v296
  %v351 = vunpack.c.l.b16 %v297
  %v352 = vpack.c.b16 %v341, %v340
  %v353 = vpack.c.b16 %v343, %v342
  %v354 = vpack.c.b16 %v345, %v344
  %v355 = vpack.c.b16 %v347, %v346
  %v356 = vpack.c.b16 %v349, %v348
  %v357 = vpack.c.b16 %v351, %v350
  %vm364 = vcmask 785408
  %v366 = vsel %vm364, %v322, 0
  %v369 = vsel %vm364, %v323, 0
  %v372 = vsel %vm364, %v324, 0
  %v375 = vsel %vm364, %v325, 0
  %v378 = vsel %vm364, %v326, 0
  %v381 = vsel %vm364, %v327, 0
  %383 = vmatpush.bf16.msra.mxu0 0
  %384 = vmatpush.bf16.msra.mxu0 0
  %385 = vmatpush.bf16.msra.mxu0 %v357
  %386 = vmatpush.bf16.msra.mxu0 %v356
  %387 = vmatpush.bf16.msra.mxu0 %v355
  %388 = vmatpush.bf16.msra.mxu0 %v354
  %389 = vmatpush.bf16.msra.mxu0 %v353
  %390 = vmatpush.bf16.msra.mxu0 %v352
  %391 = vmatmul.bf16.gmra.mxu0 %v366
  %v392 = vpop.f32.mrf.mxu0
  %v393 = vadd.f32 0.0, %v392
  %v394 = vpop.f32.mrf.mxu0
  %v395 = vadd.f32 0.0, %v394
  %396 = vmatmul.bf16.gmra.mxu0 %v369
  %v397 = vpop.f32.mrf.mxu0
  %v398 = vadd.f32 0.0, %v397
  %v399 = vpop.f32.mrf.mxu0
  %v400 = vadd.f32 0.0, %v399
  %401 = vmatmul.bf16.gmra.mxu0 %v372
  %v402 = vpop.f32.mrf.mxu0
  %v403 = vadd.f32 0.0, %v402
  %v404 = vpop.f32.mrf.mxu0
  %v405 = vadd.f32 0.0, %v404
  %406 = vmatmul.bf16.gmra.mxu0 %v375
  %v407 = vpop.f32.mrf.mxu0
  %v408 = vadd.f32 0.0, %v407
  %v409 = vpop.f32.mrf.mxu0
  %v410 = vadd.f32 0.0, %v409
  %411 = vmatmul.bf16.gmra.mxu0 %v378
  %v412 = vpop.f32.mrf.mxu0
  %v413 = vadd.f32 0.0, %v412
  %v414 = vpop.f32.mrf.mxu0
  %v415 = vadd.f32 0.0, %v414
  %416 = vmatmul.bf16.gmra.mxu0 %v381
  %v417 = vpop.f32.mrf.mxu0
  %v418 = vadd.f32 0.0, %v417
  %v419 = vpop.f32.mrf.mxu0
  %v420 = vadd.f32 0.0, %v419
  %421 = vdwg.mxu0
  %v422 = vmul.f32 %v393, 0.9
  %v423 = vmul.f32 %v395, 0.9
  %v424 = vmul.f32 %v398, 0.9
  %v425 = vmul.f32 %v400, 0.9
  %v426 = vmul.f32 %v403, 0.9
  %v427 = vmul.f32 %v405, 0.9
  %v428 = vmul.f32 %v408, 0.9
  %v429 = vmul.f32 %v410, 0.9
  %v430 = vmul.f32 %v413, 0.9
  %v431 = vmul.f32 %v415, 0.9
  %v432 = vmul.f32 %v418, 0.9
  %v433 = vmul.f32 %v420, 0.9
  %v434 = vld [vmem:[%s1] sm:$0xff]
  %v435 = vld [vmem:[%s1 + $0x8] sm:$0xff]
  %v436 = vld [vmem:[%s1 + $0x10] sm:$0xff]
  %v437 = vld [vmem:[%s1 + $0x18] sm:$0xff]
  %v438 = vld [vmem:[%s1 + $0x20] sm:$0xff]
  %v439 = vld [vmem:[%s1 + $0x28] sm:$0xff]
  %v440 = vld [vmem:[%s1 + $0x30] sm:$0xff]
  %v441 = vld [vmem:[%s1 + $0x38] sm:$0xff]
  %v442 = vld [vmem:[%s1 + $0x40] sm:$0xff]
  %v443 = vld [vmem:[%s1 + $0x48] sm:$0xff]
  %v444 = vld [vmem:[%s1 + $0x50] sm:$0xff]
  %v445 = vld [vmem:[%s1 + $0x58] sm:$0xff]
  %v446 = vmul.f32 %v434, 0.1
  %v447 = vmul.f32 %v435, 0.1
  %v448 = vmul.f32 %v436, 0.1
  %v449 = vmul.f32 %v437, 0.1
  %v450 = vmul.f32 %v438, 0.1
  %v451 = vmul.f32 %v439, 0.1
  %v452 = vmul.f32 %v440, 0.1
  %v453 = vmul.f32 %v441, 0.1
  %v454 = vmul.f32 %v442, 0.1
  %v455 = vmul.f32 %v443, 0.1
  %v456 = vmul.f32 %v444, 0.1
  %v457 = vmul.f32 %v445, 0.1
  %v458 = vadd.f32 %v422, %v446
  %v459 = vadd.f32 %v423, %v447
  %v460 = vadd.f32 %v424, %v448
  %v461 = vadd.f32 %v425, %v449
  %v462 = vadd.f32 %v426, %v450
  %v463 = vadd.f32 %v427, %v451
  %v464 = vadd.f32 %v428, %v452
  %v465 = vadd.f32 %v429, %v453
  %v466 = vadd.f32 %v430, %v454
  %v467 = vadd.f32 %v431, %v455
  %v468 = vadd.f32 %v432, %v456
  %v469 = vadd.f32 %v433, %v457
  %470 = vst [vmem:[%s2] sm:$0xff] %v458
  %471 = vst [vmem:[%s2 + $0x8] sm:$0xff] %v459
  %472 = vst [vmem:[%s2 + $0x10] sm:$0xff] %v460
  %473 = vst [vmem:[%s2 + $0x18] sm:$0xff] %v461
  %474 = vst [vmem:[%s2 + $0x20] sm:$0xff] %v462
  %475 = vst [vmem:[%s2 + $0x28] sm:$0xff] %v463
  %476 = vst [vmem:[%s2 + $0x30] sm:$0xff] %v464
  %477 = vst [vmem:[%s2 + $0x38] sm:$0xff] %v465
  %478 = vst [vmem:[%s2 + $0x40] sm:$0xff] %v466
  %479 = vst [vmem:[%s2 + $0x48] sm:$0xff] %v467
  %480 = vst [vmem:[%s2 + $0x50] sm:$0xff] %v468
  %481 = vst [vmem:[%s2 + $0x58] sm:$0xff] %v469
  // Predicated region
  $region17: #{gcn_net_propagation.5} parent=0 // pred_check
    _
  $region18: #{gcn_net_propagation.5} parent=0 // pred_check_branch
    %483 = sbr.rel (0) target = $region20
  $region19: #{gcn_net_propagation.5} parent=0 // pred_region
    _
  $region20: #{gcn_net_propagation.5} parent=0 // pred_fallthru
    _
  // Predicated region
  $region21: #{gcn_net_propagation.5} parent=0 // pred_check
    _
  $region22: #{gcn_net_propagation.5} parent=0 // pred_check_branch
    %485 = sbr.rel (0) target = $region24
  $region23: #{gcn_net_propagation.5} parent=0 // pred_region
    _
  $region24: #{gcn_net_propagation.5} parent=0 // pred_fallthru
    _

</llo_original>
